<compile_context>
chip_gen: v6e
topology: v6e:2x2x1
jax: 0.10.0
libtpu: 0.0.40
codegen_flags: <defaults>
</compile_context>

<pallas_src>
import functools

import jax
import jax.numpy as jnp
from jax.experimental import pallas as pl
from jax.experimental.pallas import tpu as pltpu


def _round_up(x, m):
    return (x + m - 1) // m * m


def _proj_agg_kernel(
    small_ref,        # (TB, 6d)    f32  [rel_re|rel_im|lhs_re|lhs_im|start_re|start_im]
    rembs_ref,        # (TB*N, 2d)  f32  refer_embs rows (batch-flattened)
    rr_ref,           # (TB*N, 2d)  f32  refer_r rows (batch-flattened)
    w1_q_ref,         # (2d, 2d)    bf16 W1^T rows acting on query_r (= rel)
    w1_r_ref,         # (2d, 2d)    bf16 W1^T rows acting on refer_r
    b1_ref,           # (1, 2d)     f32
    w2_ref,           # (2d, 2d)    bf16 W2^T
    b2_ref,           # (1, 2d)     f32
    out_ref,          # (TB, 2d)    f32  [re|im]
    *,
    n_refer,
):
    tb, six_d = small_ref.shape
    d = six_d // 6
    two_d = 2 * d
    n = n_refer
    m = tb * n
    f32 = jnp.float32
    bf16 = jnp.bfloat16

    # ---- unpack the small per-batch tile ------------------------------------
    small = small_ref[...]                               # (TB, 6d) f32
    rel = small[:, :two_d]                               # (TB, 2d)
    rel_re, rel_im = rel[:, :d], rel[:, d:]
    lhs_re = small[:, two_d:3 * d]
    lhs_im = small[:, 3 * d:4 * d]
    s_re = small[:, 4 * d:5 * d]
    s_im = small[:, 5 * d:]

    # ---- query_emb = lhs (complex *) rel -------------------------------------
    q_re = lhs_re * rel_re - lhs_im * rel_im             # (TB, d) f32
    q_im = lhs_re * rel_im + lhs_im * rel_re
    fq = jnp.concatenate([q_re, q_im], axis=-1)          # (TB, 2d)

    # ---- attn_layer_1 with W1 split (no cat([query_r, refer_r])) -------------
    rr = rr_ref[...]                                     # (M, 2d) f32 (also used for bias)
    q_contrib = jnp.dot(rel.astype(bf16), w1_q_ref[...],
                        preferred_element_type=f32) + b1_ref[...]     # (TB, 2d), b1 folded
    r_contrib = jnp.dot(rr.astype(bf16), w1_r_ref[...],
                        preferred_element_type=f32)                   # (M, 2d)
    h = jnp.maximum(r_contrib.reshape(tb, n, two_d) + q_contrib[:, None, :], 0.0)

    # ---- attn_layer_2: single fused (2d -> 2d) matmul -------------------------
    attn = jnp.dot(h.reshape(m, two_d).astype(bf16), w2_ref[...],
                   preferred_element_type=f32) + b2_ref[...]          # (M, 2d) f32
    attn = attn.reshape(tb, n, two_d)

    # ---- bias = refer_embs - start (complex *) refer_r, weighted reduce ------
    # Process real then imag sequentially to limit live (TB, N, d) f32 temporaries.
    rr3 = rr.reshape(tb, n, two_d)
    rr_re3, rr_im3 = rr3[:, :, :d], rr3[:, :, d:]
    rembs = rembs_ref[...].reshape(tb, n, two_d)
    s_re_b = s_re[:, None, :]
    s_im_b = s_im[:, None, :]

    bias_re = rembs[:, :, :d] - (s_re_b * rr_re3 - s_im_b * rr_im3)
    fr_re = jnp.sum(attn[:, :, :d] * bias_re, axis=1)                 # (TB, d)
    bias_im = rembs[:, :, d:] - (s_re_b * rr_im3 + s_im_b * rr_re3)
    fr_im = jnp.sum(attn[:, :, d:] * bias_im, axis=1)
    fr = jnp.concatenate([fr_re, fr_im], axis=-1)                     # (TB, 2d)

    # ---- L1-norm rescaling (single EUP reciprocal) + residual add ------------
    ref_norm = jnp.sum(jnp.abs(fr), axis=-1, keepdims=True)           # (TB, 1)
    q_norm = jnp.sum(jnp.abs(fq), axis=-1, keepdims=True)
    # fr / (1e-9 + ref_norm/q_norm*10) == fr * q_norm / (10*ref_norm + 1e-9*q_norm)
    # +1e-30 keeps padded all-zero rows finite (0 * ~1e30 = 0, no NaN).
    scale = q_norm * pl.reciprocal(ref_norm * 10.0 + q_norm * 1e-9 + 1e-30, approx=True)

    out_ref[...] = (fq + fr * scale).astype(out_ref.dtype)


def projection_aggregating(lhs, refer_embs, rel, refer_r, start_embs, params, dim,
                           *, batch_tile=256):
    """Mirrors ProjectionAggregating.forward (2-D start_embs path).

    lhs, rel    : tuples of (B, dim) arrays (real, imag)
    refer_embs  : (B, N, 2*dim)
    refer_r     : (B, N, 2*dim)
    start_embs  : (B, 2*dim)
    params      : (w1_t [4d,2d], b1 [1,2d], w2_t [2d,2d], b2 [1,2d])
    returns     : tuple of (B, dim) arrays (real, imag)
    """
    w1_t, b1, w2_t, b2 = params
    B, N, _ = refer_embs.shape
    d = dim
    two_d = 2 * d
    f32, bf16 = jnp.float32, jnp.bfloat16

    # Batch tile: multiple of 8, capped at ceil(B/2) so the grid has >=2 steps when B
    # allows (v7x megacore: shard batch axis over both TensorCores).
    tb = _round_up(min(batch_tile, max(8, _round_up(-(-B // 2), 8))), 8)
    Bp = _round_up(B, tb)

    def pad_b(x):
        if Bp == B:
            return x
        return jnp.pad(x, [(0, Bp - B)] + [(0, 0)] * (x.ndim - 1))

    # One packed (Bp, 6d) f32 array for all small per-batch inputs (1 DMA per step).
    small = pad_b(jnp.concatenate(
        [rel[0], rel[1], lhs[0], lhs[1], start_embs], axis=-1).astype(f32))   # (Bp, 6d)

    # Big (B, N, 2d) tensors: stream once in f32; batch-flatten is a free reshape.
    rembs_flat = pad_b(refer_embs.astype(f32)).reshape(Bp * N, two_d)
    rr_flat = pad_b(refer_r.astype(f32)).reshape(Bp * N, two_d)

    # Weights (layer-1 input order in the module is [rel_re|rel_im|rr_re|rr_im]).
    w1_q = w1_t[:two_d, :].astype(bf16)          # (2d, 2d)
    w1_r = w1_t[two_d:, :].astype(bf16)          # (2d, 2d)
    w2 = w2_t.astype(bf16)                       # (2d, 2d)
    b1_f = b1.astype(f32)
    b2_f = b2.astype(f32)

    grid = (Bp // tb,)
    M = Bp * N
    cost = pl.CostEstimate(
        flops=int(4 * M * two_d * two_d + 2 * Bp * two_d * two_d + 16 * M * d),
        transcendentals=int(Bp),
        bytes_accessed=int(4 * (2 * M * two_d) + 4 * Bp * (6 * d + two_d)
                           + 2 * 3 * two_d * two_d + 8 * two_d),
    )

    small_spec = pl.BlockSpec((tb, 6 * d), lambda b: (b, 0))
    big_spec = pl.BlockSpec((tb * N, two_d), lambda b: (b, 0))
    out_spec = pl.BlockSpec((tb, two_d), lambda b: (b, 0))

    def const_spec(shape):
        return pl.BlockSpec(shape, lambda b: (0, 0))

    out = pl.pallas_call(
        functools.partial(_proj_agg_kernel, n_refer=N),
        grid=grid,
        in_specs=[
            small_spec,                              # packed small per-batch inputs
            big_spec, big_spec,                      # refer_embs, refer_r (flattened, f32)
            const_spec((two_d, two_d)),              # w1_q
            const_spec((two_d, two_d)),              # w1_r
            const_spec((1, two_d)),                  # b1
            const_spec((two_d, two_d)),              # w2
            const_spec((1, two_d)),                  # b2
        ],
        out_specs=out_spec,
        out_shape=jax.ShapeDtypeStruct((Bp, two_d), f32),
        compiler_params=pltpu.CompilerParams(dimension_semantics=("parallel",)),
        cost_estimate=cost,
    )(small, rembs_flat, rr_flat, w1_q, w1_r, b1_f, w2, b2_f)

    return out[:B, :d], out[:B, d:]


def _reference(lhs, refer_embs, rel, refer_r, start_embs, params, dim):
    """Pure-JAX f32 reference (direct transcription of the PyTorch forward)."""
    w1_t, b1, w2_t, b2 = params
    query_emb = jnp.concatenate(
        [lhs[0] * rel[0] - lhs[1] * rel[1], lhs[0] * rel[1] + lhs[1] * rel[0]], axis=-1)
    rr0, rr1 = refer_r[:, :, :dim], refer_r[:, :, dim:]
    s0 = start_embs[:, None, :dim]
    s1 = start_embs[:, None, dim:]
    var_re = s0 * rr0 - s1 * rr1
    var_im = s0 * rr1 + s1 * rr0
    query_r = jnp.repeat(jnp.concatenate(rel, axis=-1)[:, None, :], rr0.shape[1], axis=1)
    refer_r_cat = jnp.concatenate([rr0, rr1], axis=-1)
    bias = refer_embs - jnp.concatenate([var_re, var_im], axis=-1)
    act1 = jax.nn.relu(jnp.concatenate([query_r, refer_r_cat], axis=-1) @ w1_t + b1)
    final_refer = jnp.sum((act1 @ w2_t + b2) * bias, axis=-2)
    ref_norm = jnp.sum(jnp.abs(final_refer), axis=-1, keepdims=True)
    q_norm = jnp.sum(jnp.abs(query_emb), axis=-1, keepdims=True)
    final_refer = final_refer / (1e-9 + ref_norm / q_norm * 10.0)
    fq = query_emb + final_refer
    return fq[:, :dim], fq[:, dim:]


def _xavier_uniform(key, fan_out, fan_in):
    bound = (6.0 / (fan_in + fan_out)) ** 0.5
    # PyTorch weight shape is [out, in]; return the transposed [in, out] for x @ W^T.
    w = jax.random.uniform(key, (fan_out, fan_in), jnp.float32, -bound, bound)
    return w.T


if __name__ == "__main__":
    DIM, B, N = 32, 64, 8       # tb caps at ceil(B/2)=32 -> grid (2,), M = tb*N = 256
    key = jax.random.PRNGKey(0)
    ks = jax.random.split(key, 11)

    lhs = (jax.random.normal(ks[0], (B, DIM), jnp.float32),
           jax.random.normal(ks[1], (B, DIM), jnp.float32))
    rel = (jax.random.normal(ks[2], (B, DIM), jnp.float32),
           jax.random.normal(ks[3], (B, DIM), jnp.float32))
    refer_embs = jax.random.normal(ks[4], (B, N, 2 * DIM), jnp.float32)
    refer_r = jax.random.normal(ks[5], (B, N, 2 * DIM), jnp.float32)
    start_embs = jax.random.normal(ks[6], (B, 2 * DIM), jnp.float32)

    # Deterministic parameter init (xavier_uniform weights, PyTorch-style uniform biases).
    w1_t = _xavier_uniform(ks[7], 2 * DIM, 4 * DIM)                  # [4d, 2d]
    w2_t = _xavier_uniform(ks[8], 2 * DIM, 2 * DIM)                  # [2d, 2d]
    b1 = jax.random.uniform(ks[9], (1, 2 * DIM), jnp.float32,
                            -(1.0 / (4 * DIM) ** 0.5), (1.0 / (4 * DIM) ** 0.5))
    b2 = jax.random.uniform(ks[10], (1, 2 * DIM), jnp.float32,
                            -(1.0 / (2 * DIM) ** 0.5), (1.0 / (2 * DIM) ** 0.5))
    params = (w1_t, b1, w2_t, b2)

    run = jax.jit(functools.partial(projection_aggregating, dim=DIM))
    out_re, out_im = run(lhs, refer_embs, rel, refer_r, start_embs, params)
    jax.block_until_ready((out_re, out_im))

    ref_re, ref_im = _reference(lhs, refer_embs, rel, refer_r, start_embs, params, DIM)
    assert out_re.shape == (B, DIM) and out_im.shape == (B, DIM)
    # Tolerance covers bf16 matmul inputs/weights + approx reciprocal (f32 accumulation).
    assert jnp.allclose(out_re, ref_re, atol=5e-2, rtol=5e-2), \
        float(jnp.max(jnp.abs(out_re - ref_re)))
    assert jnp.allclose(out_im, ref_im, atol=5e-2, rtol=5e-2), \
        float(jnp.max(jnp.abs(out_im - ref_im)))

    print("KERNEL_OK")
</pallas_src>

<mosaic_0001>
module attributes {stable_mosaic.version = 11 : i64} {
  func.func @_proj_agg_kernel(%arg0: i32, %arg1: memref<32x192xf32, #tpu.memory_space<vmem>>, %arg2: memref<256x64xf32, #tpu.memory_space<vmem>>, %arg3: memref<256x64xf32, #tpu.memory_space<vmem>>, %arg4: memref<64x64xbf16, #tpu.memory_space<vmem>>, %arg5: memref<64x64xbf16, #tpu.memory_space<vmem>>, %arg6: memref<1x64xf32, #tpu.memory_space<vmem>>, %arg7: memref<64x64xbf16, #tpu.memory_space<vmem>>, %arg8: memref<1x64xf32, #tpu.memory_space<vmem>>, %arg9: memref<32x64xf32, #tpu.memory_space<vmem>>) attributes {dimension_semantics = [#tpu.dimension_semantics<parallel>], iteration_bounds = array<i64: 2>, scalar_prefetch = 0 : i64, scratch_operands = 0 : i64, tpu.core_type = #tpu.core_type<tc>, window_params = [{transform_indices = @transform_0, window_bounds = array<i64: 32, 192>}, {transform_indices = @transform_1, window_bounds = array<i64: 256, 64>}, {transform_indices = @transform_2, window_bounds = array<i64: 256, 64>}, {pipeline_mode = #tpu.pipeline_mode<synchronous>, transform_indices = @transform_3, window_bounds = array<i64: 64, 64>}, {pipeline_mode = #tpu.pipeline_mode<synchronous>, transform_indices = @transform_4, window_bounds = array<i64: 64, 64>}, {pipeline_mode = #tpu.pipeline_mode<synchronous>, transform_indices = @transform_5, window_bounds = array<i64: 1, 64>}, {pipeline_mode = #tpu.pipeline_mode<synchronous>, transform_indices = @transform_6, window_bounds = array<i64: 64, 64>}, {pipeline_mode = #tpu.pipeline_mode<synchronous>, transform_indices = @transform_7, window_bounds = array<i64: 1, 64>}, {transform_indices = @transform_8, window_bounds = array<i64: 32, 64>}]} {
    %c0 = arith.constant 0 : index
    %c0_0 = arith.constant 0 : index
    %0 = vector.load %arg1[%c0, %c0_0] : memref<32x192xf32, #tpu.memory_space<vmem>>, vector<32x192xf32>
    %1 = vector.extract_strided_slice %0 {offsets = [0, 0], sizes = [32, 64], strides = [1, 1]} : vector<32x192xf32> to vector<32x64xf32>
    %2 = vector.extract_strided_slice %1 {offsets = [0, 0], sizes = [32, 32], strides = [1, 1]} : vector<32x64xf32> to vector<32x32xf32>
    %3 = vector.extract_strided_slice %1 {offsets = [0, 32], sizes = [32, 32], strides = [1, 1]} : vector<32x64xf32> to vector<32x32xf32>
    %4 = vector.extract_strided_slice %0 {offsets = [0, 64], sizes = [32, 32], strides = [1, 1]} : vector<32x192xf32> to vector<32x32xf32>
    %5 = vector.extract_strided_slice %0 {offsets = [0, 96], sizes = [32, 32], strides = [1, 1]} : vector<32x192xf32> to vector<32x32xf32>
    %6 = vector.extract_strided_slice %0 {offsets = [0, 128], sizes = [32, 32], strides = [1, 1]} : vector<32x192xf32> to vector<32x32xf32>
    %7 = vector.extract_strided_slice %0 {offsets = [0, 160], sizes = [32, 32], strides = [1, 1]} : vector<32x192xf32> to vector<32x32xf32>
    %8 = arith.mulf %4, %2 : vector<32x32xf32>
    %9 = arith.mulf %5, %3 : vector<32x32xf32>
    %10 = arith.subf %8, %9 : vector<32x32xf32>
    %11 = arith.mulf %4, %3 : vector<32x32xf32>
    %12 = arith.mulf %5, %2 : vector<32x32xf32>
    %13 = arith.addf %11, %12 : vector<32x32xf32>
    %14 = tpu.concatenate %10, %13 in 1 : vector<32x32xf32>, vector<32x32xf32> -> vector<32x64xf32>
    %c0_1 = arith.constant 0 : index
    %c0_2 = arith.constant 0 : index
    %15 = vector.load %arg3[%c0_1, %c0_2] : memref<256x64xf32, #tpu.memory_space<vmem>>, vector<256x64xf32>
    %16 = arith.truncf %1 : vector<32x64xf32> to vector<32x64xbf16>
    %c0_3 = arith.constant 0 : index
    %c0_4 = arith.constant 0 : index
    %17 = vector.load %arg4[%c0_3, %c0_4] : memref<64x64xbf16, #tpu.memory_space<vmem>>, vector<64x64xbf16>
    %cst = arith.constant dense<0.000000e+00> : vector<32x64xf32>
    %18 = tpu.matmul %16, %17, %cst {dimension_numbers = #tpu.dot_dimension_numbers<[1], [0], [0], [1], [0, 0, 1, 1], [], []>} : vector<32x64xbf16>, vector<64x64xbf16>, vector<32x64xf32> -> vector<32x64xf32>
    %c0_5 = arith.constant 0 : index
    %c0_6 = arith.constant 0 : index
    %19 = vector.load %arg6[%c0_5, %c0_6] : memref<1x64xf32, #tpu.memory_space<vmem>>, vector<1x64xf32>
    %20 = vector.broadcast %19 : vector<1x64xf32> to vector<32x64xf32>
    %21 = arith.addf %18, %20 : vector<32x64xf32>
    %22 = arith.truncf %15 : vector<256x64xf32> to vector<256x64xbf16>
    %c0_7 = arith.constant 0 : index
    %c0_8 = arith.constant 0 : index
    %23 = vector.load %arg5[%c0_7, %c0_8] : memref<64x64xbf16, #tpu.memory_space<vmem>>, vector<64x64xbf16>
    %cst_9 = arith.constant dense<0.000000e+00> : vector<256x64xf32>
    %24 = tpu.matmul %22, %23, %cst_9 {dimension_numbers = #tpu.dot_dimension_numbers<[1], [0], [0], [1], [0, 0, 1, 1], [], []>} : vector<256x64xbf16>, vector<64x64xbf16>, vector<256x64xf32> -> vector<256x64xf32>
    %25 = vector.shape_cast %24 : vector<256x64xf32> to vector<32x8x64xf32>
    %26 = vector.shape_cast %21 : vector<32x64xf32> to vector<32x1x64xf32>
    %27 = vector.broadcast %26 : vector<32x1x64xf32> to vector<32x8x64xf32>
    %28 = arith.addf %25, %27 : vector<32x8x64xf32>
    %cst_10 = arith.constant 0.000000e+00 : f32
    %29 = vector.broadcast %cst_10 : f32 to vector<32x8x64xf32>
    %30 = arith.maximumf %28, %29 : vector<32x8x64xf32>
    %31 = vector.shape_cast %30 : vector<32x8x64xf32> to vector<256x64xf32>
    %32 = arith.truncf %31 : vector<256x64xf32> to vector<256x64xbf16>
    %c0_11 = arith.constant 0 : index
    %c0_12 = arith.constant 0 : index
    %33 = vector.load %arg7[%c0_11, %c0_12] : memref<64x64xbf16, #tpu.memory_space<vmem>>, vector<64x64xbf16>
    %cst_13 = arith.constant dense<0.000000e+00> : vector<256x64xf32>
    %34 = tpu.matmul %32, %33, %cst_13 {dimension_numbers = #tpu.dot_dimension_numbers<[1], [0], [0], [1], [0, 0, 1, 1], [], []>} : vector<256x64xbf16>, vector<64x64xbf16>, vector<256x64xf32> -> vector<256x64xf32>
    %c0_14 = arith.constant 0 : index
    %c0_15 = arith.constant 0 : index
    %35 = vector.load %arg8[%c0_14, %c0_15] : memref<1x64xf32, #tpu.memory_space<vmem>>, vector<1x64xf32>
    %36 = vector.broadcast %35 : vector<1x64xf32> to vector<256x64xf32>
    %37 = arith.addf %34, %36 : vector<256x64xf32>
    %38 = vector.shape_cast %37 : vector<256x64xf32> to vector<32x8x64xf32>
    %39 = vector.shape_cast %15 : vector<256x64xf32> to vector<32x8x64xf32>
    %40 = vector.extract_strided_slice %39 {offsets = [0, 0, 0], sizes = [32, 8, 32], strides = [1, 1, 1]} : vector<32x8x64xf32> to vector<32x8x32xf32>
    %41 = vector.extract_strided_slice %39 {offsets = [0, 0, 32], sizes = [32, 8, 32], strides = [1, 1, 1]} : vector<32x8x64xf32> to vector<32x8x32xf32>
    %c0_16 = arith.constant 0 : index
    %c0_17 = arith.constant 0 : index
    %42 = vector.load %arg2[%c0_16, %c0_17] : memref<256x64xf32, #tpu.memory_space<vmem>>, vector<256x64xf32>
    %43 = vector.shape_cast %42 : vector<256x64xf32> to vector<32x8x64xf32>
    %44 = vector.shape_cast %6 : vector<32x32xf32> to vector<32x1x32xf32>
    %45 = vector.shape_cast %7 : vector<32x32xf32> to vector<32x1x32xf32>
    %46 = vector.extract_strided_slice %43 {offsets = [0, 0, 0], sizes = [32, 8, 32], strides = [1, 1, 1]} : vector<32x8x64xf32> to vector<32x8x32xf32>
    %47 = vector.broadcast %44 : vector<32x1x32xf32> to vector<32x8x32xf32>
    %48 = arith.mulf %47, %40 : vector<32x8x32xf32>
    %49 = vector.broadcast %45 : vector<32x1x32xf32> to vector<32x8x32xf32>
    %50 = arith.mulf %49, %41 : vector<32x8x32xf32>
    %51 = arith.subf %48, %50 : vector<32x8x32xf32>
    %52 = arith.subf %46, %51 : vector<32x8x32xf32>
    %53 = vector.extract_strided_slice %38 {offsets = [0, 0, 0], sizes = [32, 8, 32], strides = [1, 1, 1]} : vector<32x8x64xf32> to vector<32x8x32xf32>
    %54 = arith.mulf %53, %52 : vector<32x8x32xf32>
    %cst_18 = arith.constant dense<0.000000e+00> : vector<32x32xf32>
    %55 = vector.multi_reduction <add>, %54, %cst_18 [1] : vector<32x8x32xf32> to vector<32x32xf32>
    %56 = vector.extract_strided_slice %43 {offsets = [0, 0, 32], sizes = [32, 8, 32], strides = [1, 1, 1]} : vector<32x8x64xf32> to vector<32x8x32xf32>
    %57 = vector.broadcast %44 : vector<32x1x32xf32> to vector<32x8x32xf32>
    %58 = arith.mulf %57, %41 : vector<32x8x32xf32>
    %59 = vector.broadcast %45 : vector<32x1x32xf32> to vector<32x8x32xf32>
    %60 = arith.mulf %59, %40 : vector<32x8x32xf32>
    %61 = arith.addf %58, %60 : vector<32x8x32xf32>
    %62 = arith.subf %56, %61 : vector<32x8x32xf32>
    %63 = vector.extract_strided_slice %38 {offsets = [0, 0, 32], sizes = [32, 8, 32], strides = [1, 1, 1]} : vector<32x8x64xf32> to vector<32x8x32xf32>
    %64 = arith.mulf %63, %62 : vector<32x8x32xf32>
    %cst_19 = arith.constant dense<0.000000e+00> : vector<32x32xf32>
    %65 = vector.multi_reduction <add>, %64, %cst_19 [1] : vector<32x8x32xf32> to vector<32x32xf32>
    %66 = tpu.concatenate %55, %65 in 1 : vector<32x32xf32>, vector<32x32xf32> -> vector<32x64xf32>
    %67 = math.absf %66 : vector<32x64xf32>
    %cst_20 = arith.constant dense<0.000000e+00> : vector<32xf32>
    %68 = vector.multi_reduction <add>, %67, %cst_20 [1] : vector<32x64xf32> to vector<32xf32>
    %69 = vector.shape_cast %68 : vector<32xf32> to vector<32x1xf32>
    %70 = math.absf %14 : vector<32x64xf32>
    %cst_21 = arith.constant dense<0.000000e+00> : vector<32xf32>
    %71 = vector.multi_reduction <add>, %70, %cst_21 [1] : vector<32x64xf32> to vector<32xf32>
    %72 = vector.shape_cast %71 : vector<32xf32> to vector<32x1xf32>
    %cst_22 = arith.constant 1.000000e+01 : f32
    %73 = vector.broadcast %cst_22 : f32 to vector<32x1xf32>
    %74 = arith.mulf %69, %73 : vector<32x1xf32>
    %cst_23 = arith.constant 9.99999971E-10 : f32
    %75 = vector.broadcast %cst_23 : f32 to vector<32x1xf32>
    %76 = arith.mulf %72, %75 : vector<32x1xf32>
    %77 = arith.addf %74, %76 : vector<32x1xf32>
    %cst_24 = arith.constant 1.000000e-30 : f32
    %78 = vector.broadcast %cst_24 : f32 to vector<32x1xf32>
    %79 = arith.addf %77, %78 : vector<32x1xf32>
    %80 = tpu.reciprocal %79 {approx = true} : vector<32x1xf32> -> vector<32x1xf32>
    %81 = arith.mulf %72, %80 : vector<32x1xf32>
    %82 = vector.broadcast %81 : vector<32x1xf32> to vector<32x64xf32>
    %83 = arith.mulf %66, %82 : vector<32x64xf32>
    %84 = arith.addf %14, %83 : vector<32x64xf32>
    %c0_25 = arith.constant 0 : index
    %c0_26 = arith.constant 0 : index
    %85 = vector.load %arg9[%c0_25, %c0_26] : memref<32x64xf32, #tpu.memory_space<vmem>>, vector<32x64xf32>
    tpu.vector_store %arg9[%c0_25, %c0_26], %84 {strides = array<i32>} : memref<32x64xf32, #tpu.memory_space<vmem>>, vector<32x64xf32>,
    return
  }
  func.func @transform_0(%arg0: i32) -> (i32, i32) {
    %c0_i32 = arith.constant 0 : i32
    %c0_i32_0 = arith.constant 0 : i32
    return %arg0, %c0_i32 : i32, i32
  }
  func.func @transform_1(%arg0: i32) -> (i32, i32) {
    %c0_i32 = arith.constant 0 : i32
    %c0_i32_0 = arith.constant 0 : i32
    return %arg0, %c0_i32 : i32, i32
  }
  func.func @transform_2(%arg0: i32) -> (i32, i32) {
    %c0_i32 = arith.constant 0 : i32
    %c0_i32_0 = arith.constant 0 : i32
    return %arg0, %c0_i32 : i32, i32
  }
  func.func @transform_3(%arg0: i32) -> (i32, i32) {
    %c0_i32 = arith.constant 0 : i32
    %c0_i32_0 = arith.constant 0 : i32
    %c0_i32_1 = arith.constant 0 : i32
    return %c0_i32, %c0_i32_0 : i32, i32
  }
  func.func @transform_4(%arg0: i32) -> (i32, i32) {
    %c0_i32 = arith.constant 0 : i32
    %c0_i32_0 = arith.constant 0 : i32
    %c0_i32_1 = arith.constant 0 : i32
    return %c0_i32, %c0_i32_0 : i32, i32
  }
  func.func @transform_5(%arg0: i32) -> (i32, i32) {
    %c0_i32 = arith.constant 0 : i32
    %c0_i32_0 = arith.constant 0 : i32
    %c0_i32_1 = arith.constant 0 : i32
    return %c0_i32, %c0_i32_0 : i32, i32
  }
  func.func @transform_6(%arg0: i32) -> (i32, i32) {
    %c0_i32 = arith.constant 0 : i32
    %c0_i32_0 = arith.constant 0 : i32
    %c0_i32_1 = arith.constant 0 : i32
    return %c0_i32, %c0_i32_0 : i32, i32
  }
  func.func @transform_7(%arg0: i32) -> (i32, i32) {
    %c0_i32 = arith.constant 0 : i32
    %c0_i32_0 = arith.constant 0 : i32
    %c0_i32_1 = arith.constant 0 : i32
    return %c0_i32, %c0_i32_0 : i32, i32
  }
  func.func @transform_8(%arg0: i32) -> (i32, i32) {
    %c0_i32 = arith.constant 0 : i32
    %c0_i32_0 = arith.constant 0 : i32
    return %arg0, %c0_i32 : i32, i32
  }
}

</mosaic_0001>

<llo_original>
// kernel: projection_aggregating.1
$region0: #{projection_aggregating.1}
  #allocation0 [shape = 'u32[]', space=smem, size = 0x4, offset = 0x4, fixed_abs, tag = 'smem constant byte address 0x4 - core index']
  #allocation1 [shape = 'u32[144,128]{1,0:T(1,128)}', space=vmem, size = 0x12000, scoped, tag = 'internal scratch']
  %s0 = inlined_call_operand.vmem [shape: f32[64,192], index: 0, kind: input, shape index: {}]
  %s1 = inlined_call_operand.vmem [shape: f32[512,64], index: 1, kind: input, shape index: {}]
  %s2 = inlined_call_operand.vmem [shape: f32[512,64], index: 2, kind: input, shape index: {}]
  %s3 = inlined_call_operand.vmem [shape: bf16[64,64], index: 3, kind: input, shape index: {}]
  %s4 = inlined_call_operand.vmem [shape: bf16[64,64], index: 4, kind: input, shape index: {}]
  %s5 = inlined_call_operand.vmem [shape: f32[1,64], index: 5, kind: input, shape index: {}]
  %s6 = inlined_call_operand.vmem [shape: bf16[64,64], index: 6, kind: input, shape index: {}]
  %s7 = inlined_call_operand.vmem [shape: f32[1,64], index: 7, kind: input, shape index: {}]
  %s8 = inlined_call_operand.vmem [shape: f32[64,64], index: 8, kind: output, shape index: {}]
  %s9 = sld [smem:[#allocation0]]
  $region65: #{projection_aggregating.1} parent=0
    _
  %s11 = ssub.s32 1, %s9
  %s12 = scalar_select 0, %s11, %s9
  loop: start=0, step=1, limit=4
  $region2: #{projection_aggregating.1} parent=0 // loop_pre_header
    _
  $region3: #{projection_aggregating.1} parent=0 // loop_header
    %s14 = sphi 0, %s18
    %p15 = scmp.ge.s32.totalorder %s14, 4
    %s24 = sphi 0, %s26
    %s27 = sphi 0, %s24
    %s28 = sphi 0, %s27
    %s44 = sphi 0, %s28
    %s50 = sphi 0, %s52
    %s53 = sphi 0, %s50
    %s54 = sphi 0, %s53
    %s70 = sphi 0, %s54
    %s76 = sphi 0, %s78
    %s79 = sphi 0, %s76
    %s80 = sphi 0, %s79
    %s96 = sphi 0, %s80
    %s100 = sphi 0, %s100
    %s102 = sphi 0, %s100
    %s103 = sphi 0, %s102
    %s117 = sphi 0, %s103
    %s121 = sphi 0, %s121
    %s123 = sphi 0, %s121
    %s124 = sphi 0, %s123
    %s138 = sphi 0, %s124
    %s142 = sphi 0, %s142
    %s144 = sphi 0, %s142
    %s145 = sphi 0, %s144
    %s159 = sphi 0, %s145
    %s163 = sphi 0, %s163
    %s165 = sphi 0, %s163
    %s166 = sphi 0, %s165
    %s180 = sphi 0, %s166
    %s184 = sphi 0, %s184
    %s186 = sphi 0, %s184
    %s187 = sphi 0, %s186
    %s201 = sphi 0, %s187
    %s207 = sphi 0, %s209
    %s210 = sphi 0, %s207
    %s211 = sphi 0, %s210
    %s227 = sphi 0, %s211
  $region4: #{projection_aggregating.1} parent=0 // loop_header_branch
    %17 = sbr.rel (%p15) target = $region8
  $region5: #{projection_aggregating.1} parent=0 // loop_body
    %s19 = ssub.s32 %s14, 1
    %s20 = ssub.s32 %s14, 2
    %s21 = sadd.s32 %s14, 1
    %s22 = ssub.s32 %s14, %s21
    %p23 = scmp.eq.s32.totalorder %s22, 0
    %s25 = sadd.s32 %s24, 1
    %s26 = scalar_select %p23, %s24, %s25
    %p29 = pneg %p23
    %p30 = scmp.eq.s32.totalorder %s14, 1
    %p31 = por %p29, %p30
    %p32 = scmp.ne.s32.totalorder %s24, %s27
    %p33 = scmp.eq.s32.totalorder %s14, 0
    %p34 = por %p32, %p33
    %p35 = scmp.ne.s32.totalorder %s24, %s27
    %p36 = scmp.eq.s32.totalorder %s19, 1
    %p37 = por %p35, %p36
    %p38 = scmp.ne.s32.totalorder %s27, %s28
    %p39 = scmp.eq.s32.totalorder %s19, 0
    %p40 = por %p38, %p39
    %p41 = scmp.ne.s32.totalorder %s27, %s28
    %p42 = scmp.eq.s32.totalorder %s20, 1
    %p43 = por %p41, %p42
    %p45 = scmp.ne.s32.totalorder %s28, %s44
    %p46 = scmp.eq.s32.totalorder %s20, 0
    %p47 = por %p45, %p46
    %s48 = ssub.s32 %s14, %s21
    %p49 = scmp.eq.s32.totalorder %s48, 0
    %s51 = sadd.s32 %s50, 1
    %s52 = scalar_select %p49, %s50, %s51
    %p55 = pneg %p49
    %p56 = scmp.eq.s32.totalorder %s14, 1
    %p57 = por %p55, %p56
    %p58 = scmp.ne.s32.totalorder %s50, %s53
    %p59 = scmp.eq.s32.totalorder %s14, 0
    %p60 = por %p58, %p59
    %p61 = scmp.ne.s32.totalorder %s50, %s53
    %p62 = scmp.eq.s32.totalorder %s19, 1
    %p63 = por %p61, %p62
    %p64 = scmp.ne.s32.totalorder %s53, %s54
    %p65 = scmp.eq.s32.totalorder %s19, 0
    %p66 = por %p64, %p65
    %p67 = scmp.ne.s32.totalorder %s53, %s54
    %p68 = scmp.eq.s32.totalorder %s20, 1
    %p69 = por %p67, %p68
    %p71 = scmp.ne.s32.totalorder %s54, %s70
    %p72 = scmp.eq.s32.totalorder %s20, 0
    %p73 = por %p71, %p72
    %s74 = ssub.s32 %s14, %s21
    %p75 = scmp.eq.s32.totalorder %s74, 0
    %s77 = sadd.s32 %s76, 1
    %s78 = scalar_select %p75, %s76, %s77
    %p81 = pneg %p75
    %p82 = scmp.eq.s32.totalorder %s14, 1
    %p83 = por %p81, %p82
    %p84 = scmp.ne.s32.totalorder %s76, %s79
    %p85 = scmp.eq.s32.totalorder %s14, 0
    %p86 = por %p84, %p85
    %p87 = scmp.ne.s32.totalorder %s76, %s79
    %p88 = scmp.eq.s32.totalorder %s19, 1
    %p89 = por %p87, %p88
    %p90 = scmp.ne.s32.totalorder %s79, %s80
    %p91 = scmp.eq.s32.totalorder %s19, 0
    %p92 = por %p90, %p91
    %p93 = scmp.ne.s32.totalorder %s79, %s80
    %p94 = scmp.eq.s32.totalorder %s20, 1
    %p95 = por %p93, %p94
    %p97 = scmp.ne.s32.totalorder %s80, %s96
    %p98 = scmp.eq.s32.totalorder %s20, 0
    %p99 = por %p97, %p98
    %s101 = sadd.s32 %s100, 1
    %p104 = scmp.eq.s32.totalorder %s14, 1
    %p105 = scmp.ne.s32.totalorder %s100, %s102
    %p106 = scmp.eq.s32.totalorder %s14, 0
    %p107 = por %p105, %p106
    %p108 = scmp.ne.s32.totalorder %s100, %s102
    %p109 = scmp.eq.s32.totalorder %s19, 1
    %p110 = por %p108, %p109
    %p111 = scmp.ne.s32.totalorder %s102, %s103
    %p112 = scmp.eq.s32.totalorder %s19, 0
    %p113 = por %p111, %p112
    %p114 = scmp.ne.s32.totalorder %s102, %s103
    %p115 = scmp.eq.s32.totalorder %s20, 1
    %p116 = por %p114, %p115
    %p118 = scmp.ne.s32.totalorder %s103, %s117
    %p119 = scmp.eq.s32.totalorder %s20, 0
    %p120 = por %p118, %p119
    %s122 = sadd.s32 %s121, 1
    %p125 = scmp.eq.s32.totalorder %s14, 1
    %p126 = scmp.ne.s32.totalorder %s121, %s123
    %p127 = scmp.eq.s32.totalorder %s14, 0
    %p128 = por %p126, %p127
    %p129 = scmp.ne.s32.totalorder %s121, %s123
    %p130 = scmp.eq.s32.totalorder %s19, 1
    %p131 = por %p129, %p130
    %p132 = scmp.ne.s32.totalorder %s123, %s124
    %p133 = scmp.eq.s32.totalorder %s19, 0
    %p134 = por %p132, %p133
    %p135 = scmp.ne.s32.totalorder %s123, %s124
    %p136 = scmp.eq.s32.totalorder %s20, 1
    %p137 = por %p135, %p136
    %p139 = scmp.ne.s32.totalorder %s124, %s138
    %p140 = scmp.eq.s32.totalorder %s20, 0
    %p141 = por %p139, %p140
    %s143 = sadd.s32 %s142, 1
    %p146 = scmp.eq.s32.totalorder %s14, 1
    %p147 = scmp.ne.s32.totalorder %s142, %s144
    %p148 = scmp.eq.s32.totalorder %s14, 0
    %p149 = por %p147, %p148
    %p150 = scmp.ne.s32.totalorder %s142, %s144
    %p151 = scmp.eq.s32.totalorder %s19, 1
    %p152 = por %p150, %p151
    %p153 = scmp.ne.s32.totalorder %s144, %s145
    %p154 = scmp.eq.s32.totalorder %s19, 0
    %p155 = por %p153, %p154
    %p156 = scmp.ne.s32.totalorder %s144, %s145
    %p157 = scmp.eq.s32.totalorder %s20, 1
    %p158 = por %p156, %p157
    %p160 = scmp.ne.s32.totalorder %s145, %s159
    %p161 = scmp.eq.s32.totalorder %s20, 0
    %p162 = por %p160, %p161
    %s164 = sadd.s32 %s163, 1
    %p167 = scmp.eq.s32.totalorder %s14, 1
    %p168 = scmp.ne.s32.totalorder %s163, %s165
    %p169 = scmp.eq.s32.totalorder %s14, 0
    %p170 = por %p168, %p169
    %p171 = scmp.ne.s32.totalorder %s163, %s165
    %p172 = scmp.eq.s32.totalorder %s19, 1
    %p173 = por %p171, %p172
    %p174 = scmp.ne.s32.totalorder %s165, %s166
    %p175 = scmp.eq.s32.totalorder %s19, 0
    %p176 = por %p174, %p175
    %p177 = scmp.ne.s32.totalorder %s165, %s166
    %p178 = scmp.eq.s32.totalorder %s20, 1
    %p179 = por %p177, %p178
    %p181 = scmp.ne.s32.totalorder %s166, %s180
    %p182 = scmp.eq.s32.totalorder %s20, 0
    %p183 = por %p181, %p182
    %s185 = sadd.s32 %s184, 1
    %p188 = scmp.eq.s32.totalorder %s14, 1
    %p189 = scmp.ne.s32.totalorder %s184, %s186
    %p190 = scmp.eq.s32.totalorder %s14, 0
    %p191 = por %p189, %p190
    %p192 = scmp.ne.s32.totalorder %s184, %s186
    %p193 = scmp.eq.s32.totalorder %s19, 1
    %p194 = por %p192, %p193
    %p195 = scmp.ne.s32.totalorder %s186, %s187
    %p196 = scmp.eq.s32.totalorder %s19, 0
    %p197 = por %p195, %p196
    %p198 = scmp.ne.s32.totalorder %s186, %s187
    %p199 = scmp.eq.s32.totalorder %s20, 1
    %p200 = por %p198, %p199
    %p202 = scmp.ne.s32.totalorder %s187, %s201
    %p203 = scmp.eq.s32.totalorder %s20, 0
    %p204 = por %p202, %p203
    %s205 = ssub.s32 %s14, %s21
    %p206 = scmp.eq.s32.totalorder %s205, 0
    %s208 = sadd.s32 %s207, 1
    %s209 = scalar_select %p206, %s207, %s208
    %p212 = pneg %p206
    %p213 = scmp.eq.s32.totalorder %s14, 1
    %p214 = por %p212, %p213
    %p215 = scmp.ne.s32.totalorder %s207, %s210
    %p216 = scmp.eq.s32.totalorder %s14, 0
    %p217 = por %p215, %p216
    %p218 = scmp.ne.s32.totalorder %s207, %s210
    %p219 = scmp.eq.s32.totalorder %s19, 1
    %p220 = por %p218, %p219
    %p221 = scmp.ne.s32.totalorder %s210, %s211
    %p222 = scmp.eq.s32.totalorder %s19, 0
    %p223 = por %p221, %p222
    %p224 = scmp.ne.s32.totalorder %s210, %s211
    %p225 = scmp.eq.s32.totalorder %s20, 1
    %p226 = por %p224, %p225
    %p228 = scmp.ne.s32.totalorder %s211, %s227
    %p229 = scmp.eq.s32.totalorder %s20, 0
    %p230 = por %p228, %p229
    %p231 = scmp.le.s32.totalorder 1, %s14
    %p232 = scmp.lt.s32.totalorder %s14, 3
    %p233 = pnand %p231, %p232
    %p234 = pneg %p233
    // Predicated region
    $region9: #{projection_aggregating.1} parent=5 // pred_check
      _
    $region10: #{projection_aggregating.1} parent=5 // pred_check_branch
      %236 = sbr.rel (%p233) target = $region12
    $region11: #{projection_aggregating.1} parent=5 // pred_region
      %s237 = ssub.s32 %s14, 1
      // Predicated region
      $region13: #{projection_aggregating.1} parent=11 // pred_check
        %p238 = pneg %p113
      $region14: #{projection_aggregating.1} parent=11 // pred_check_branch
        %240 = sbr.rel (%p238) target = $region16
      $region15: #{projection_aggregating.1} parent=11 // pred_region
        _
      $region16: #{projection_aggregating.1} parent=11 // pred_fallthru
        _
      // Predicated region
      $region17: #{projection_aggregating.1} parent=11 // pred_check
        %p241 = pneg %p134
      $region18: #{projection_aggregating.1} parent=11 // pred_check_branch
        %243 = sbr.rel (%p241) target = $region20
      $region19: #{projection_aggregating.1} parent=11 // pred_region
        _
      $region20: #{projection_aggregating.1} parent=11 // pred_fallthru
        _
      // Predicated region
      $region21: #{projection_aggregating.1} parent=11 // pred_check
        %p244 = pneg %p155
      $region22: #{projection_aggregating.1} parent=11 // pred_check_branch
        %246 = sbr.rel (%p244) target = $region24
      $region23: #{projection_aggregating.1} parent=11 // pred_region
        _
      $region24: #{projection_aggregating.1} parent=11 // pred_fallthru
        _
      // Predicated region
      $region25: #{projection_aggregating.1} parent=11 // pred_check
        %p247 = pneg %p176
      $region26: #{projection_aggregating.1} parent=11 // pred_check_branch
        %249 = sbr.rel (%p247) target = $region28
      $region27: #{projection_aggregating.1} parent=11 // pred_region
        _
      $region28: #{projection_aggregating.1} parent=11 // pred_fallthru
        _
      // Predicated region
      $region29: #{projection_aggregating.1} parent=11 // pred_check
        %p250 = pneg %p197
      $region30: #{projection_aggregating.1} parent=11 // pred_check_branch
        %252 = sbr.rel (%p250) target = $region32
      $region31: #{projection_aggregating.1} parent=11 // pred_region
        _
      $region32: #{projection_aggregating.1} parent=11 // pred_fallthru
        _
    $region12: #{projection_aggregating.1} parent=5 // pred_fallthru
      _
    %p253 = scmp.lt.s32.totalorder %s14, 2
    // Predicated region
    $region33: #{projection_aggregating.1} parent=5 // pred_check
      %p254 = pneg %p253
    $region34: #{projection_aggregating.1} parent=5 // pred_check_branch
      %256 = sbr.rel (%p254) target = $region36
    $region35: #{projection_aggregating.1} parent=5 // pred_region
      // Predicated region
      $region37: #{projection_aggregating.1} parent=35 // pred_check
        %p257 = pneg %p34
      $region38: #{projection_aggregating.1} parent=35 // pred_check_branch
        %259 = sbr.rel (%p257) target = $region40
      $region39: #{projection_aggregating.1} parent=35 // pred_region
        %s260 = smul.u32 4, %s14
        %p261 = scmp.lt.s32.totalorder %s260, 7
        %s262 = scalar_select %p261, %s260, 7
        %s263 = smul.addr %s262, 2
        %s264 = smul.addr %s263, 8
        %s265 = scalar_lea.vmem %s0, %s264
        %s266 = smul.u32 4, %s14
      $region40: #{projection_aggregating.1} parent=35 // pred_fallthru
        _
      // Predicated region
      $region41: #{projection_aggregating.1} parent=35 // pred_check
        %p267 = pneg %p60
      $region42: #{projection_aggregating.1} parent=35 // pred_check_branch
        %269 = sbr.rel (%p267) target = $region44
      $region43: #{projection_aggregating.1} parent=35 // pred_region
        %s270 = smul.u32 32, %s14
        %p271 = scmp.lt.s32.totalorder %s270, 63
        %s272 = scalar_select %p271, %s270, 63
        %s273 = smul.addr %s272, 8
        %s274 = scalar_lea.vmem %s1, %s273
        %s275 = smul.u32 32, %s14
      $region44: #{projection_aggregating.1} parent=35 // pred_fallthru
        _
      // Predicated region
      $region45: #{projection_aggregating.1} parent=35 // pred_check
        %p276 = pneg %p86
      $region46: #{projection_aggregating.1} parent=35 // pred_check_branch
        %278 = sbr.rel (%p276) target = $region48
      $region47: #{projection_aggregating.1} parent=35 // pred_region
        %s279 = smul.u32 32, %s14
        %p280 = scmp.lt.s32.totalorder %s279, 63
        %s281 = scalar_select %p280, %s279, 63
        %s282 = smul.addr %s281, 8
        %s283 = scalar_lea.vmem %s2, %s282
        %s284 = smul.u32 32, %s14
      $region48: #{projection_aggregating.1} parent=35 // pred_fallthru
        _
    $region36: #{projection_aggregating.1} parent=5 // pred_fallthru
      _
    %p285 = scmp.le.s32.totalorder 1, %s14
    %p286 = scmp.lt.s32.totalorder %s14, 3
    %p287 = pnand %p285, %p286
    %p288 = pneg %p287
    // Predicated region
    $region49: #{projection_aggregating.1} parent=5 // pred_check
      _
    $region50: #{projection_aggregating.1} parent=5 // pred_check_branch
      %290 = sbr.rel (%p287) target = $region52
    $region51: #{projection_aggregating.1} parent=5 // pred_region
      %s291 = ssub.s32 %s14, 1
      %s292 = smul.u32 4, %s19
      %p293 = scmp.lt.s32.totalorder %s292, 7
      %s294 = scalar_select %p293, %s292, 7
      %s295 = smul.addr %s294, 2
      %s296 = smul.addr %s295, 8
      %s297 = scalar_lea.vmem %s0, %s296
      %p298 = pneg %p40
      %p299 = pneg %p37
      %s300 = smul.u32 32, %s19
      %p301 = scmp.lt.s32.totalorder %s300, 63
      %s302 = scalar_select %p301, %s300, 63
      %s303 = smul.addr %s302, 8
      %s304 = scalar_lea.vmem %s1, %s303
      %p305 = pneg %p66
      %p306 = pneg %p63
      %s307 = smul.u32 32, %s19
      %p308 = scmp.lt.s32.totalorder %s307, 63
      %s309 = scalar_select %p308, %s307, 63
      %s310 = smul.addr %s309, 8
      %s311 = scalar_lea.vmem %s2, %s310
      %p312 = pneg %p92
      %p313 = pneg %p89
      %p314 = pneg %p113
      %p315 = pneg %p110
      %p316 = pneg %p134
      %p317 = pneg %p131
      %p318 = pneg %p155
      %p319 = pneg %p152
      %p320 = pneg %p176
      %p321 = pneg %p173
      %p322 = pneg %p197
      %p323 = pneg %p194
      %p324 = pneg %p223
      %p325 = pneg %p220
      %s326 = smul.u32 4, %s19
      %p327 = scmp.lt.s32.totalorder %s326, 7
      %s328 = scalar_select %p327, %s326, 7
      %s329 = smul.addr %s328, 8
      %s330 = scalar_lea.vmem %s8, %s329
      %s331 = smul.u32 4, %s19
      %p332 = scmp.lt.s32.totalorder %s331, 7
      %s333 = scalar_select %p332, %s331, 7
      %s334 = smul.addr %s333, 2
      %s335 = smul.addr %s334, 8
      %s336 = scalar_lea.vmem %s0, %s335
      %s337 = smul.u32 4, %s19
      %s338 = smul.u32 32, %s19
      %p339 = scmp.lt.s32.totalorder %s338, 63
      %s340 = scalar_select %p339, %s338, 63
      %s341 = smul.addr %s340, 8
      %s342 = scalar_lea.vmem %s1, %s341
      %s343 = smul.u32 32, %s19
      %s344 = smul.u32 32, %s19
      %p345 = scmp.lt.s32.totalorder %s344, 63
      %s346 = scalar_select %p345, %s344, 63
      %s347 = smul.addr %s346, 8
      %s348 = scalar_lea.vmem %s2, %s347
      %s349 = smul.u32 32, %s19
      %s350 = smul.u32 4, %s19
      %p351 = scmp.lt.s32.totalorder %s350, 7
      %s352 = scalar_select %p351, %s350, 7
      %s353 = smul.addr %s352, 8
      %s354 = scalar_lea.vmem %s8, %s353
      %s355 = smul.u32 4, %s19
      %v357 = vld [vmem:[%s336] sm:$0xff]
      %v358 = vld [vmem:[%s336 + $0x8] sm:$0xff]
      %v359 = vld [vmem:[%s336 + $0x10] sm:$0xff]
      %v360 = vld [vmem:[%s336 + $0x18] sm:$0xff]
      %v361 = vld [vmem:[%s336 + $0x20] sm:$0xff]
      %v362 = vld [vmem:[%s336 + $0x28] sm:$0xff]
      %v363 = vld [vmem:[%s336 + $0x30] sm:$0xff]
      %v364 = vld [vmem:[%s336 + $0x38] sm:$0xff]
      %369 = vrot.lane.b32.xlu0 %v357, 64
      %v370 = vpop.permute.xlu0 %369
      %371 = vrot.lane.b32.xlu0 %v359, 64
      %v372 = vpop.permute.xlu0 %371
      %373 = vrot.lane.b32.xlu0 %v361, 64
      %v374 = vpop.permute.xlu0 %373
      %375 = vrot.lane.b32.xlu0 %v363, 64
      %v376 = vpop.permute.xlu0 %375
      %v381 = vmul.f32 %v357, %v370
      %v382 = vmul.f32 %v359, %v372
      %v383 = vmul.f32 %v361, %v374
      %v384 = vmul.f32 %v363, %v376
      %389 = vrot.lane.b32.xlu0 %v381, 96
      %v390 = vpop.permute.xlu0 %389
      %391 = vrot.lane.b32.xlu0 %v382, 96
      %v392 = vpop.permute.xlu0 %391
      %393 = vrot.lane.b32.xlu0 %v383, 96
      %v394 = vpop.permute.xlu0 %393
      %395 = vrot.lane.b32.xlu0 %v384, 96
      %v396 = vpop.permute.xlu0 %395
      %v401 = vsub.f32 %v381, %v390
      %v402 = vsub.f32 %v382, %v392
      %v403 = vsub.f32 %v383, %v394
      %v404 = vsub.f32 %v384, %v396
      %405 = vrot.lane.b32.xlu0 %v357, 32
      %v406 = vpop.permute.xlu0 %405
      %407 = vrot.lane.b32.xlu0 %v359, 32
      %v408 = vpop.permute.xlu0 %407
      %409 = vrot.lane.b32.xlu0 %v361, 32
      %v410 = vpop.permute.xlu0 %409
      %411 = vrot.lane.b32.xlu0 %v363, 32
      %v412 = vpop.permute.xlu0 %411
      %v417 = vmul.f32 %v357, %v406
      %v418 = vmul.f32 %v359, %v408
      %v419 = vmul.f32 %v361, %v410
      %v420 = vmul.f32 %v363, %v412
      %421 = vrot.lane.b32.xlu0 %v357, 96
      %v422 = vpop.permute.xlu0 %421
      %423 = vrot.lane.b32.xlu0 %v359, 96
      %v424 = vpop.permute.xlu0 %423
      %425 = vrot.lane.b32.xlu0 %v361, 96
      %v426 = vpop.permute.xlu0 %425
      %427 = vrot.lane.b32.xlu0 %v363, 96
      %v428 = vpop.permute.xlu0 %427
      %v433 = vmul.f32 %v357, %v422
      %v434 = vmul.f32 %v359, %v424
      %v435 = vmul.f32 %v361, %v426
      %v436 = vmul.f32 %v363, %v428
      %441 = vrot.lane.b32.xlu0 %v433, 96
      %v442 = vpop.permute.xlu0 %441
      %443 = vrot.lane.b32.xlu0 %v434, 96
      %v444 = vpop.permute.xlu0 %443
      %445 = vrot.lane.b32.xlu0 %v435, 96
      %v446 = vpop.permute.xlu0 %445
      %447 = vrot.lane.b32.xlu0 %v436, 96
      %v448 = vpop.permute.xlu0 %447
      %v453 = vadd.f32 %v417, %v442
      %v454 = vadd.f32 %v418, %v444
      %v455 = vadd.f32 %v419, %v446
      %v456 = vadd.f32 %v420, %v448
      %461 = vrot.lane.b32.xlu0 %v401, 64
      %v462 = vpop.permute.xlu0 %461
      %463 = vrot.lane.b32.xlu0 %v402, 64
      %v464 = vpop.permute.xlu0 %463
      %465 = vrot.lane.b32.xlu0 %v403, 64
      %v466 = vpop.permute.xlu0 %465
      %467 = vrot.lane.b32.xlu0 %v404, 64
      %v468 = vpop.permute.xlu0 %467
      %477 = vrot.lane.b32.xlu0 %v453, 96
      %v478 = vpop.permute.xlu0 %477
      %479 = vrot.lane.b32.xlu0 %v454, 96
      %v480 = vpop.permute.xlu0 %479
      %481 = vrot.lane.b32.xlu0 %v455, 96
      %v482 = vpop.permute.xlu0 %481
      %483 = vrot.lane.b32.xlu0 %v456, 96
      %v484 = vpop.permute.xlu0 %483
      %vm489 = vcmask 261120
      %v490 = vsel %vm489, %v462, %v478
      %v491 = vsel %vm489, %v464, %v480
      %v492 = vsel %vm489, %v466, %v482
      %v493 = vsel %vm489, %v468, %v484
      %v494 = vld [vmem:[%s348] sm:$0xff]
      %v495 = vld [vmem:[%s348 + $0x8] sm:$0xff]
      %v496 = vld [vmem:[%s348 + $0x10] sm:$0xff]
      %v497 = vld [vmem:[%s348 + $0x18] sm:$0xff]
      %v498 = vld [vmem:[%s348 + $0x20] sm:$0xff]
      %v499 = vld [vmem:[%s348 + $0x28] sm:$0xff]
      %v500 = vld [vmem:[%s348 + $0x30] sm:$0xff]
      %v501 = vld [vmem:[%s348 + $0x38] sm:$0xff]
      %v502 = vld [vmem:[%s348 + $0x40] sm:$0xff]
      %v503 = vld [vmem:[%s348 + $0x48] sm:$0xff]
      %v504 = vld [vmem:[%s348 + $0x50] sm:$0xff]
      %v505 = vld [vmem:[%s348 + $0x58] sm:$0xff]
      %v506 = vld [vmem:[%s348 + $0x60] sm:$0xff]
      %v507 = vld [vmem:[%s348 + $0x68] sm:$0xff]
      %v508 = vld [vmem:[%s348 + $0x70] sm:$0xff]
      %v509 = vld [vmem:[%s348 + $0x78] sm:$0xff]
      %v510 = vld [vmem:[%s348 + $0x80] sm:$0xff]
      %v511 = vld [vmem:[%s348 + $0x88] sm:$0xff]
      %v512 = vld [vmem:[%s348 + $0x90] sm:$0xff]
      %v513 = vld [vmem:[%s348 + $0x98] sm:$0xff]
      %v514 = vld [vmem:[%s348 + $0xa0] sm:$0xff]
      %v515 = vld [vmem:[%s348 + $0xa8] sm:$0xff]
      %v516 = vld [vmem:[%s348 + $0xb0] sm:$0xff]
      %v517 = vld [vmem:[%s348 + $0xb8] sm:$0xff]
      %v518 = vld [vmem:[%s348 + $0xc0] sm:$0xff]
      %v519 = vld [vmem:[%s348 + $0xc8] sm:$0xff]
      %v520 = vld [vmem:[%s348 + $0xd0] sm:$0xff]
      %v521 = vld [vmem:[%s348 + $0xd8] sm:$0xff]
      %v522 = vld [vmem:[%s348 + $0xe0] sm:$0xff]
      %v523 = vld [vmem:[%s348 + $0xe8] sm:$0xff]
      %v524 = vld [vmem:[%s348 + $0xf0] sm:$0xff]
      %v525 = vld [vmem:[%s348 + $0xf8] sm:$0xff]
      %v526 = vpack.c.bf16 %v359, %v357
      %v527 = vpack.c.bf16 %v363, %v361
      %v528 = vld [vmem:[%s3] sm:$0xf]
      %v529 = vld [vmem:[%s3 + $0x4] sm:$0xf]
      %v530 = vld [vmem:[%s3 + $0x8] sm:$0xf]
      %v531 = vld [vmem:[%s3 + $0xc] sm:$0xf]
      %v532 = vld [vmem:[%s3 + $0x10] sm:$0xf]
      %v533 = vld [vmem:[%s3 + $0x14] sm:$0xf]
      %v534 = vld [vmem:[%s3 + $0x18] sm:$0xf]
      %v535 = vld [vmem:[%s3 + $0x1c] sm:$0xf]
      %v536 = vld [vmem:[%s5] sm:$0x1]
      %v538 = vlaneseq
      %v539 = vshrl.u32 %v538, 7
      %v540 = vsub.s32 0, %v539
      %v541 = vrot.slane %v536, %v540
      %v551 = vunpack.c.l.b16 %v528
      %v552 = vunpack.c.l.b16 %v529
      %v553 = vunpack.c.l.b16 %v530
      %v554 = vunpack.c.l.b16 %v531
      %v555 = vunpack.c.l.b16 %v532
      %v556 = vunpack.c.l.b16 %v533
      %v557 = vunpack.c.l.b16 %v534
      %v558 = vunpack.c.l.b16 %v535
      %v559 = vpack.c.b16 %v552, %v551
      %v560 = vpack.c.b16 %v554, %v553
      %v561 = vpack.c.b16 %v556, %v555
      %v562 = vpack.c.b16 %v558, %v557
      %vm567 = vcmask 523264
      %v569 = vsel %vm567, %v526, 0
      %v572 = vsel %vm567, %v527, 0
      %574 = vmatprep.subr.bf16.mxu0 0
      %575 = vmatpush1.bf16.msra.mxu0 0
      %576 = vmatprep.subr.bf16.mxu0 0
      %577 = vmatpush1.bf16.msra.mxu0 0
      %578 = vmatprep.subr.bf16.mxu0 0
      %579 = vmatpush1.bf16.msra.mxu0 0
      %580 = vmatprep.subr.bf16.mxu0 0
      %581 = vmatpush1.bf16.msra.mxu0 0
      %582 = vmatprep.subr.bf16.mxu0 0
      %583 = vmatpush1.bf16.msra.mxu0 %v562
      %584 = vmatprep.subr.bf16.mxu0 0
      %585 = vmatpush1.bf16.msra.mxu0 %v561
      %586 = vmatprep.subr.bf16.mxu0 0
      %587 = vmatpush1.bf16.msra.mxu0 %v560
      %588 = vmatprep.subr.bf16.mxu0 0
      %589 = vmatpush1.bf16.msra.mxu0 %v559
      %590 = vmatprep.subr.bf16.mxu0 0
      %591 = vmatpush2.bf16.msra.mxu0 0
      %592 = vmatprep.subr.bf16.mxu0 0
      %593 = vmatpush2.bf16.msra.mxu0 0
      %594 = vmatprep.subr.bf16.mxu0 0
      %595 = vmatpush2.bf16.msra.mxu0 0
      %596 = vmatprep.subr.bf16.mxu0 0
      %597 = vmatpush2.bf16.msra.mxu0 0
      %598 = vmatprep.subr.bf16.mxu0 0
      %599 = vmatpush2.bf16.msra.mxu0 0
      %600 = vmatprep.subr.bf16.mxu0 0
      %601 = vmatpush2.bf16.msra.mxu0 0
      %602 = vmatprep.subr.bf16.mxu0 0
      %603 = vmatpush2.bf16.msra.mxu0 0
      %604 = vmatprep.subr.bf16.mxu0 0
      %605 = vmatpush2.bf16.msra.mxu0 0
      %606 = vmatprep.mubr.bf16.mxu0 0
      %607 = vmatmul.mubr.bf16.gmra.mxu0 %v569
      %v608 = vpop.f32.mrf.mxu0
      %v609 = vadd.f32 %v541, %v608
      %v610 = vpop.f32.mrf.mxu0
      %v611 = vpop.f32.mrf.mxu0
      %v612 = vadd.f32 %v541, %v611
      %v613 = vpop.f32.mrf.mxu0
      %614 = vmatprep.mubr.bf16.mxu0 0
      %615 = vmatmul.mubr.bf16.gmra.mxu0 %v572
      %v616 = vpop.f32.mrf.mxu0
      %v617 = vadd.f32 %v541, %v616
      %v618 = vpop.f32.mrf.mxu0
      %v619 = vpop.f32.mrf.mxu0
      %v620 = vadd.f32 %v541, %v619
      %v621 = vpop.f32.mrf.mxu0
      %622 = vdwg.mxu0
      %v623 = vpack.c.bf16 %v495, %v494
      %v624 = vpack.c.bf16 %v497, %v496
      %v625 = vpack.c.bf16 %v499, %v498
      %v626 = vpack.c.bf16 %v501, %v500
      %v627 = vpack.c.bf16 %v503, %v502
      %v628 = vpack.c.bf16 %v505, %v504
      %v629 = vpack.c.bf16 %v507, %v506
      %v630 = vpack.c.bf16 %v509, %v508
      %v631 = vpack.c.bf16 %v511, %v510
      %v632 = vpack.c.bf16 %v513, %v512
      %v633 = vpack.c.bf16 %v515, %v514
      %v634 = vpack.c.bf16 %v517, %v516
      %v635 = vpack.c.bf16 %v519, %v518
      %v636 = vpack.c.bf16 %v521, %v520
      %v637 = vpack.c.bf16 %v523, %v522
      %v638 = vpack.c.bf16 %v525, %v524
      %v639 = vld [vmem:[%s4] sm:$0xf]
      %v640 = vld [vmem:[%s4 + $0x4] sm:$0xf]
      %v641 = vld [vmem:[%s4 + $0x8] sm:$0xf]
      %v642 = vld [vmem:[%s4 + $0xc] sm:$0xf]
      %v643 = vld [vmem:[%s4 + $0x10] sm:$0xf]
      %v644 = vld [vmem:[%s4 + $0x14] sm:$0xf]
      %v645 = vld [vmem:[%s4 + $0x18] sm:$0xf]
      %v646 = vld [vmem:[%s4 + $0x1c] sm:$0xf]
      %v655 = vunpack.c.l.b16 %v639
      %v656 = vunpack.c.l.b16 %v640
      %v657 = vunpack.c.l.b16 %v641
      %v658 = vunpack.c.l.b16 %v642
      %v659 = vunpack.c.l.b16 %v643
      %v660 = vunpack.c.l.b16 %v644
      %v661 = vunpack.c.l.b16 %v645
      %v662 = vunpack.c.l.b16 %v646
      %v663 = vpack.c.b16 %v656, %v655
      %v664 = vpack.c.b16 %v658, %v657
      %v665 = vpack.c.b16 %v660, %v659
      %v666 = vpack.c.b16 %v662, %v661
      %v672 = vsel %vm567, %v623, 0
      %v675 = vsel %vm567, %v624, 0
      %v678 = vsel %vm567, %v625, 0
      %v681 = vsel %vm567, %v626, 0
      %v684 = vsel %vm567, %v627, 0
      %v687 = vsel %vm567, %v628, 0
      %v690 = vsel %vm567, %v629, 0
      %v693 = vsel %vm567, %v630, 0
      %v696 = vsel %vm567, %v631, 0
      %v699 = vsel %vm567, %v632, 0
      %v702 = vsel %vm567, %v633, 0
      %v705 = vsel %vm567, %v634, 0
      %v708 = vsel %vm567, %v635, 0
      %v711 = vsel %vm567, %v636, 0
      %v714 = vsel %vm567, %v637, 0
      %v717 = vsel %vm567, %v638, 0
      %719 = vmatprep.subr.bf16.mxu0 0
      %720 = vmatpush1.bf16.msra.mxu0 0
      %721 = vmatprep.subr.bf16.mxu0 0
      %722 = vmatpush1.bf16.msra.mxu0 0
      %723 = vmatprep.subr.bf16.mxu0 0
      %724 = vmatpush1.bf16.msra.mxu0 0
      %725 = vmatprep.subr.bf16.mxu0 0
      %726 = vmatpush1.bf16.msra.mxu0 0
      %727 = vmatprep.subr.bf16.mxu0 0
      %728 = vmatpush1.bf16.msra.mxu0 %v666
      %729 = vmatprep.subr.bf16.mxu0 0
      %730 = vmatpush1.bf16.msra.mxu0 %v665
      %731 = vmatprep.subr.bf16.mxu0 0
      %732 = vmatpush1.bf16.msra.mxu0 %v664
      %733 = vmatprep.subr.bf16.mxu0 0
      %734 = vmatpush1.bf16.msra.mxu0 %v663
      %735 = vmatprep.subr.bf16.mxu0 0
      %736 = vmatpush2.bf16.msra.mxu0 0
      %737 = vmatprep.subr.bf16.mxu0 0
      %738 = vmatpush2.bf16.msra.mxu0 0
      %739 = vmatprep.subr.bf16.mxu0 0
      %740 = vmatpush2.bf16.msra.mxu0 0
      %741 = vmatprep.subr.bf16.mxu0 0
      %742 = vmatpush2.bf16.msra.mxu0 0
      %743 = vmatprep.subr.bf16.mxu0 0
      %744 = vmatpush2.bf16.msra.mxu0 0
      %745 = vmatprep.subr.bf16.mxu0 0
      %746 = vmatpush2.bf16.msra.mxu0 0
      %747 = vmatprep.subr.bf16.mxu0 0
      %748 = vmatpush2.bf16.msra.mxu0 0
      %749 = vmatprep.subr.bf16.mxu0 0
      %750 = vmatpush2.bf16.msra.mxu0 0
      %751 = vmatprep.mubr.bf16.mxu0 0
      %752 = vmatmul.mubr.bf16.gmra.mxu0 %v672
      %v753 = vpop.f32.mrf.mxu0
      %v754 = vadd.f32 0.0, %v753
      %v755 = vpop.f32.mrf.mxu0
      %v756 = vpop.f32.mrf.mxu0
      %v757 = vadd.f32 0.0, %v756
      %v758 = vpop.f32.mrf.mxu0
      %759 = vmatprep.mubr.bf16.mxu0 0
      %760 = vmatmul.mubr.bf16.gmra.mxu0 %v675
      %v761 = vpop.f32.mrf.mxu0
      %v762 = vadd.f32 0.0, %v761
      %v763 = vpop.f32.mrf.mxu0
      %v764 = vpop.f32.mrf.mxu0
      %v765 = vadd.f32 0.0, %v764
      %v766 = vpop.f32.mrf.mxu0
      %767 = vmatprep.mubr.bf16.mxu0 0
      %768 = vmatmul.mubr.bf16.gmra.mxu0 %v678
      %v769 = vpop.f32.mrf.mxu0
      %v770 = vadd.f32 0.0, %v769
      %v771 = vpop.f32.mrf.mxu0
      %v772 = vpop.f32.mrf.mxu0
      %v773 = vadd.f32 0.0, %v772
      %v774 = vpop.f32.mrf.mxu0
      %775 = vmatprep.mubr.bf16.mxu0 0
      %776 = vmatmul.mubr.bf16.gmra.mxu0 %v681
      %v777 = vpop.f32.mrf.mxu0
      %v778 = vadd.f32 0.0, %v777
      %v779 = vpop.f32.mrf.mxu0
      %v780 = vpop.f32.mrf.mxu0
      %v781 = vadd.f32 0.0, %v780
      %v782 = vpop.f32.mrf.mxu0
      %783 = vmatprep.mubr.bf16.mxu0 0
      %784 = vmatmul.mubr.bf16.gmra.mxu0 %v684
      %v785 = vpop.f32.mrf.mxu0
      %v786 = vadd.f32 0.0, %v785
      %v787 = vpop.f32.mrf.mxu0
      %v788 = vpop.f32.mrf.mxu0
      %v789 = vadd.f32 0.0, %v788
      %v790 = vpop.f32.mrf.mxu0
      %791 = vmatprep.mubr.bf16.mxu0 0
      %792 = vmatmul.mubr.bf16.gmra.mxu0 %v687
      %v793 = vpop.f32.mrf.mxu0
      %v794 = vadd.f32 0.0, %v793
      %v795 = vpop.f32.mrf.mxu0
      %v796 = vpop.f32.mrf.mxu0
      %v797 = vadd.f32 0.0, %v796
      %v798 = vpop.f32.mrf.mxu0
      %799 = vmatprep.mubr.bf16.mxu0 0
      %800 = vmatmul.mubr.bf16.gmra.mxu0 %v690
      %v801 = vpop.f32.mrf.mxu0
      %v802 = vadd.f32 0.0, %v801
      %v803 = vpop.f32.mrf.mxu0
      %v804 = vpop.f32.mrf.mxu0
      %v805 = vadd.f32 0.0, %v804
      %v806 = vpop.f32.mrf.mxu0
      %807 = vmatprep.mubr.bf16.mxu0 0
      %808 = vmatmul.mubr.bf16.gmra.mxu0 %v693
      %v809 = vpop.f32.mrf.mxu0
      %v810 = vadd.f32 0.0, %v809
      %v811 = vpop.f32.mrf.mxu0
      %v812 = vpop.f32.mrf.mxu0
      %v813 = vadd.f32 0.0, %v812
      %v814 = vpop.f32.mrf.mxu0
      %815 = vmatprep.mubr.bf16.mxu0 0
      %816 = vmatmul.mubr.bf16.gmra.mxu0 %v696
      %v817 = vpop.f32.mrf.mxu0
      %v818 = vadd.f32 0.0, %v817
      %v819 = vpop.f32.mrf.mxu0
      %v820 = vpop.f32.mrf.mxu0
      %v821 = vadd.f32 0.0, %v820
      %v822 = vpop.f32.mrf.mxu0
      %823 = vmatprep.mubr.bf16.mxu0 0
      %824 = vmatmul.mubr.bf16.gmra.mxu0 %v699
      %v825 = vpop.f32.mrf.mxu0
      %v826 = vadd.f32 0.0, %v825
      %v827 = vpop.f32.mrf.mxu0
      %v828 = vpop.f32.mrf.mxu0
      %v829 = vadd.f32 0.0, %v828
      %v830 = vpop.f32.mrf.mxu0
      %831 = vmatprep.mubr.bf16.mxu0 0
      %832 = vmatmul.mubr.bf16.gmra.mxu0 %v702
      %v833 = vpop.f32.mrf.mxu0
      %v834 = vadd.f32 0.0, %v833
      %v835 = vpop.f32.mrf.mxu0
      %v836 = vpop.f32.mrf.mxu0
      %v837 = vadd.f32 0.0, %v836
      %v838 = vpop.f32.mrf.mxu0
      %839 = vmatprep.mubr.bf16.mxu0 0
      %840 = vmatmul.mubr.bf16.gmra.mxu0 %v705
      %v841 = vpop.f32.mrf.mxu0
      %v842 = vadd.f32 0.0, %v841
      %v843 = vpop.f32.mrf.mxu0
      %v844 = vpop.f32.mrf.mxu0
      %v845 = vadd.f32 0.0, %v844
      %v846 = vpop.f32.mrf.mxu0
      %847 = vmatprep.mubr.bf16.mxu0 0
      %848 = vmatmul.mubr.bf16.gmra.mxu0 %v708
      %v849 = vpop.f32.mrf.mxu0
      %v850 = vadd.f32 0.0, %v849
      %v851 = vpop.f32.mrf.mxu0
      %v852 = vpop.f32.mrf.mxu0
      %v853 = vadd.f32 0.0, %v852
      %v854 = vpop.f32.mrf.mxu0
      %855 = vmatprep.mubr.bf16.mxu0 0
      %856 = vmatmul.mubr.bf16.gmra.mxu0 %v711
      %v857 = vpop.f32.mrf.mxu0
      %v858 = vadd.f32 0.0, %v857
      %v859 = vpop.f32.mrf.mxu0
      %v860 = vpop.f32.mrf.mxu0
      %v861 = vadd.f32 0.0, %v860
      %v862 = vpop.f32.mrf.mxu0
      %863 = vmatprep.mubr.bf16.mxu0 0
      %864 = vmatmul.mubr.bf16.gmra.mxu0 %v714
      %v865 = vpop.f32.mrf.mxu0
      %v866 = vadd.f32 0.0, %v865
      %v867 = vpop.f32.mrf.mxu0
      %v868 = vpop.f32.mrf.mxu0
      %v869 = vadd.f32 0.0, %v868
      %v870 = vpop.f32.mrf.mxu0
      %871 = vmatprep.mubr.bf16.mxu0 0
      %872 = vmatmul.mubr.bf16.gmra.mxu0 %v717
      %v873 = vpop.f32.mrf.mxu0
      %v874 = vadd.f32 0.0, %v873
      %v875 = vpop.f32.mrf.mxu0
      %v876 = vpop.f32.mrf.mxu0
      %v877 = vadd.f32 0.0, %v876
      %v878 = vpop.f32.mrf.mxu0
      %879 = vdwg.mxu0
      %v884 = vcombine.high %v609, %v609
      %v886 = vunpack.c.l.s4 1966171168
      %v887 = vunpack.c.0.s8 %v886
      %v888 = vlaneseq
      %v889 = vshrl.u32 %v888, 7
      %v890 = vsub.s32 %v887, %v889
      %v891 = vrot.slane %v609, %v890
      %v893 = vunpack.c.l.s4 1966171168
      %v894 = vunpack.c.0.s8 %v893
      %v895 = vlaneseq
      %v896 = vshrl.u32 %v895, 7
      %v897 = vsub.s32 %v894, %v896
      %v898 = vrot.slane %v884, %v897
      %v899 = vcombine.high %v891, %v891
      %v900 = vcombine.high %v898, %v898
      %v902 = vunpack.c.l.s4 1966171168
      %v903 = vunpack.c.0.s8 %v902
      %v904 = vlaneseq
      %v905 = vshrl.u32 %v904, 7
      %v906 = vsub.s32 %v903, %v905
      %v907 = vrot.slane %v891, %v906
      %v909 = vunpack.c.l.s4 1966171168
      %v910 = vunpack.c.0.s8 %v909
      %v911 = vlaneseq
      %v912 = vshrl.u32 %v911, 7
      %v913 = vsub.s32 %v910, %v912
      %v914 = vrot.slane %v898, %v913
      %v916 = vunpack.c.l.s4 1966171168
      %v917 = vunpack.c.0.s8 %v916
      %v918 = vlaneseq
      %v919 = vshrl.u32 %v918, 7
      %v920 = vsub.s32 %v917, %v919
      %v921 = vrot.slane %v899, %v920
      %v923 = vunpack.c.l.s4 1966171168
      %v924 = vunpack.c.0.s8 %v923
      %v925 = vlaneseq
      %v926 = vshrl.u32 %v925, 7
      %v927 = vsub.s32 %v924, %v926
      %v928 = vrot.slane %v900, %v927
      %v929 = vcombine.high %v907, %v907
      %v930 = vcombine.high %v914, %v914
      %v931 = vcombine.high %v921, %v921
      %v932 = vcombine.high %v928, %v928
      %v933 = vcombine.high %v612, %v612
      %v935 = vunpack.c.l.s4 1966171168
      %v936 = vunpack.c.0.s8 %v935
      %v937 = vlaneseq
      %v938 = vshrl.u32 %v937, 7
      %v939 = vsub.s32 %v936, %v938
      %v940 = vrot.slane %v612, %v939
      %v942 = vunpack.c.l.s4 1966171168
      %v943 = vunpack.c.0.s8 %v942
      %v944 = vlaneseq
      %v945 = vshrl.u32 %v944, 7
      %v946 = vsub.s32 %v943, %v945
      %v947 = vrot.slane %v933, %v946
      %v948 = vcombine.high %v940, %v940
      %v949 = vcombine.high %v947, %v947
      %v951 = vunpack.c.l.s4 1966171168
      %v952 = vunpack.c.0.s8 %v951
      %v953 = vlaneseq
      %v954 = vshrl.u32 %v953, 7
      %v955 = vsub.s32 %v952, %v954
      %v956 = vrot.slane %v940, %v955
      %v958 = vunpack.c.l.s4 1966171168
      %v959 = vunpack.c.0.s8 %v958
      %v960 = vlaneseq
      %v961 = vshrl.u32 %v960, 7
      %v962 = vsub.s32 %v959, %v961
      %v963 = vrot.slane %v947, %v962
      %v965 = vunpack.c.l.s4 1966171168
      %v966 = vunpack.c.0.s8 %v965
      %v967 = vlaneseq
      %v968 = vshrl.u32 %v967, 7
      %v969 = vsub.s32 %v966, %v968
      %v970 = vrot.slane %v948, %v969
      %v972 = vunpack.c.l.s4 1966171168
      %v973 = vunpack.c.0.s8 %v972
      %v974 = vlaneseq
      %v975 = vshrl.u32 %v974, 7
      %v976 = vsub.s32 %v973, %v975
      %v977 = vrot.slane %v949, %v976
      %v978 = vcombine.high %v956, %v956
      %v979 = vcombine.high %v963, %v963
      %v980 = vcombine.high %v970, %v970
      %v981 = vcombine.high %v977, %v977
      %v982 = vcombine.high %v617, %v617
      %v984 = vunpack.c.l.s4 1966171168
      %v985 = vunpack.c.0.s8 %v984
      %v986 = vlaneseq
      %v987 = vshrl.u32 %v986, 7
      %v988 = vsub.s32 %v985, %v987
      %v989 = vrot.slane %v617, %v988
      %v991 = vunpack.c.l.s4 1966171168
      %v992 = vunpack.c.0.s8 %v991
      %v993 = vlaneseq
      %v994 = vshrl.u32 %v993, 7
      %v995 = vsub.s32 %v992, %v994
      %v996 = vrot.slane %v982, %v995
      %v997 = vcombine.high %v989, %v989
      %v998 = vcombine.high %v996, %v996
      %v1000 = vunpack.c.l.s4 1966171168
      %v1001 = vunpack.c.0.s8 %v1000
      %v1002 = vlaneseq
      %v1003 = vshrl.u32 %v1002, 7
      %v1004 = vsub.s32 %v1001, %v1003
      %v1005 = vrot.slane %v989, %v1004
      %v1007 = vunpack.c.l.s4 1966171168
      %v1008 = vunpack.c.0.s8 %v1007
      %v1009 = vlaneseq
      %v1010 = vshrl.u32 %v1009, 7
      %v1011 = vsub.s32 %v1008, %v1010
      %v1012 = vrot.slane %v996, %v1011
      %v1014 = vunpack.c.l.s4 1966171168
      %v1015 = vunpack.c.0.s8 %v1014
      %v1016 = vlaneseq
      %v1017 = vshrl.u32 %v1016, 7
      %v1018 = vsub.s32 %v1015, %v1017
      %v1019 = vrot.slane %v997, %v1018
      %v1021 = vunpack.c.l.s4 1966171168
      %v1022 = vunpack.c.0.s8 %v1021
      %v1023 = vlaneseq
      %v1024 = vshrl.u32 %v1023, 7
      %v1025 = vsub.s32 %v1022, %v1024
      %v1026 = vrot.slane %v998, %v1025
      %v1027 = vcombine.high %v1005, %v1005
      %v1028 = vcombine.high %v1012, %v1012
      %v1029 = vcombine.high %v1019, %v1019
      %v1030 = vcombine.high %v1026, %v1026
      %v1031 = vcombine.high %v620, %v620
      %v1033 = vunpack.c.l.s4 1966171168
      %v1034 = vunpack.c.0.s8 %v1033
      %v1035 = vlaneseq
      %v1036 = vshrl.u32 %v1035, 7
      %v1037 = vsub.s32 %v1034, %v1036
      %v1038 = vrot.slane %v620, %v1037
      %v1040 = vunpack.c.l.s4 1966171168
      %v1041 = vunpack.c.0.s8 %v1040
      %v1042 = vlaneseq
      %v1043 = vshrl.u32 %v1042, 7
      %v1044 = vsub.s32 %v1041, %v1043
      %v1045 = vrot.slane %v1031, %v1044
      %v1046 = vcombine.high %v1038, %v1038
      %v1047 = vcombine.high %v1045, %v1045
      %v1049 = vunpack.c.l.s4 1966171168
      %v1050 = vunpack.c.0.s8 %v1049
      %v1051 = vlaneseq
      %v1052 = vshrl.u32 %v1051, 7
      %v1053 = vsub.s32 %v1050, %v1052
      %v1054 = vrot.slane %v1038, %v1053
      %v1056 = vunpack.c.l.s4 1966171168
      %v1057 = vunpack.c.0.s8 %v1056
      %v1058 = vlaneseq
      %v1059 = vshrl.u32 %v1058, 7
      %v1060 = vsub.s32 %v1057, %v1059
      %v1061 = vrot.slane %v1045, %v1060
      %v1063 = vunpack.c.l.s4 1966171168
      %v1064 = vunpack.c.0.s8 %v1063
      %v1065 = vlaneseq
      %v1066 = vshrl.u32 %v1065, 7
      %v1067 = vsub.s32 %v1064, %v1066
      %v1068 = vrot.slane %v1046, %v1067
      %v1070 = vunpack.c.l.s4 1966171168
      %v1071 = vunpack.c.0.s8 %v1070
      %v1072 = vlaneseq
      %v1073 = vshrl.u32 %v1072, 7
      %v1074 = vsub.s32 %v1071, %v1073
      %v1075 = vrot.slane %v1047, %v1074
      %v1076 = vcombine.high %v1054, %v1054
      %v1077 = vcombine.high %v1061, %v1061
      %v1078 = vcombine.high %v1068, %v1068
      %v1079 = vcombine.high %v1075, %v1075
      %v1080 = vlaneseq
      %v1081 = vshrl.u32 %v1080, 7
      %v1082 = vsub.s32 0, %v1081
      %v1083 = vrot.slane %v907, %v1082
      %v1084 = vlaneseq
      %v1085 = vshrl.u32 %v1084, 7
      %v1086 = vsub.s32 0, %v1085
      %v1087 = vrot.slane %v921, %v1086
      %v1088 = vlaneseq
      %v1089 = vshrl.u32 %v1088, 7
      %v1090 = vsub.s32 0, %v1089
      %v1091 = vrot.slane %v929, %v1090
      %v1092 = vlaneseq
      %v1093 = vshrl.u32 %v1092, 7
      %v1094 = vsub.s32 0, %v1093
      %v1095 = vrot.slane %v931, %v1094
      %v1096 = vlaneseq
      %v1097 = vshrl.u32 %v1096, 7
      %v1098 = vsub.s32 0, %v1097
      %v1099 = vrot.slane %v914, %v1098
      %v1100 = vlaneseq
      %v1101 = vshrl.u32 %v1100, 7
      %v1102 = vsub.s32 0, %v1101
      %v1103 = vrot.slane %v928, %v1102
      %v1104 = vlaneseq
      %v1105 = vshrl.u32 %v1104, 7
      %v1106 = vsub.s32 0, %v1105
      %v1107 = vrot.slane %v930, %v1106
      %v1108 = vlaneseq
      %v1109 = vshrl.u32 %v1108, 7
      %v1110 = vsub.s32 0, %v1109
      %v1111 = vrot.slane %v932, %v1110
      %v1112 = vlaneseq
      %v1113 = vshrl.u32 %v1112, 7
      %v1114 = vsub.s32 0, %v1113
      %v1115 = vrot.slane %v956, %v1114
      %v1116 = vlaneseq
      %v1117 = vshrl.u32 %v1116, 7
      %v1118 = vsub.s32 0, %v1117
      %v1119 = vrot.slane %v970, %v1118
      %v1120 = vlaneseq
      %v1121 = vshrl.u32 %v1120, 7
      %v1122 = vsub.s32 0, %v1121
      %v1123 = vrot.slane %v978, %v1122
      %v1124 = vlaneseq
      %v1125 = vshrl.u32 %v1124, 7
      %v1126 = vsub.s32 0, %v1125
      %v1127 = vrot.slane %v980, %v1126
      %v1128 = vlaneseq
      %v1129 = vshrl.u32 %v1128, 7
      %v1130 = vsub.s32 0, %v1129
      %v1131 = vrot.slane %v963, %v1130
      %v1132 = vlaneseq
      %v1133 = vshrl.u32 %v1132, 7
      %v1134 = vsub.s32 0, %v1133
      %v1135 = vrot.slane %v977, %v1134
      %v1136 = vlaneseq
      %v1137 = vshrl.u32 %v1136, 7
      %v1138 = vsub.s32 0, %v1137
      %v1139 = vrot.slane %v979, %v1138
      %v1140 = vlaneseq
      %v1141 = vshrl.u32 %v1140, 7
      %v1142 = vsub.s32 0, %v1141
      %v1143 = vrot.slane %v981, %v1142
      %v1144 = vlaneseq
      %v1145 = vshrl.u32 %v1144, 7
      %v1146 = vsub.s32 0, %v1145
      %v1147 = vrot.slane %v1005, %v1146
      %v1148 = vlaneseq
      %v1149 = vshrl.u32 %v1148, 7
      %v1150 = vsub.s32 0, %v1149
      %v1151 = vrot.slane %v1019, %v1150
      %v1152 = vlaneseq
      %v1153 = vshrl.u32 %v1152, 7
      %v1154 = vsub.s32 0, %v1153
      %v1155 = vrot.slane %v1027, %v1154
      %v1156 = vlaneseq
      %v1157 = vshrl.u32 %v1156, 7
      %v1158 = vsub.s32 0, %v1157
      %v1159 = vrot.slane %v1029, %v1158
      %v1160 = vlaneseq
      %v1161 = vshrl.u32 %v1160, 7
      %v1162 = vsub.s32 0, %v1161
      %v1163 = vrot.slane %v1012, %v1162
      %v1164 = vlaneseq
      %v1165 = vshrl.u32 %v1164, 7
      %v1166 = vsub.s32 0, %v1165
      %v1167 = vrot.slane %v1026, %v1166
      %v1168 = vlaneseq
      %v1169 = vshrl.u32 %v1168, 7
      %v1170 = vsub.s32 0, %v1169
      %v1171 = vrot.slane %v1028, %v1170
      %v1172 = vlaneseq
      %v1173 = vshrl.u32 %v1172, 7
      %v1174 = vsub.s32 0, %v1173
      %v1175 = vrot.slane %v1030, %v1174
      %v1176 = vlaneseq
      %v1177 = vshrl.u32 %v1176, 7
      %v1178 = vsub.s32 0, %v1177
      %v1179 = vrot.slane %v1054, %v1178
      %v1180 = vlaneseq
      %v1181 = vshrl.u32 %v1180, 7
      %v1182 = vsub.s32 0, %v1181
      %v1183 = vrot.slane %v1068, %v1182
      %v1184 = vlaneseq
      %v1185 = vshrl.u32 %v1184, 7
      %v1186 = vsub.s32 0, %v1185
      %v1187 = vrot.slane %v1076, %v1186
      %v1188 = vlaneseq
      %v1189 = vshrl.u32 %v1188, 7
      %v1190 = vsub.s32 0, %v1189
      %v1191 = vrot.slane %v1078, %v1190
      %v1192 = vlaneseq
      %v1193 = vshrl.u32 %v1192, 7
      %v1194 = vsub.s32 0, %v1193
      %v1195 = vrot.slane %v1061, %v1194
      %v1196 = vlaneseq
      %v1197 = vshrl.u32 %v1196, 7
      %v1198 = vsub.s32 0, %v1197
      %v1199 = vrot.slane %v1075, %v1198
      %v1200 = vlaneseq
      %v1201 = vshrl.u32 %v1200, 7
      %v1202 = vsub.s32 0, %v1201
      %v1203 = vrot.slane %v1077, %v1202
      %v1204 = vlaneseq
      %v1205 = vshrl.u32 %v1204, 7
      %v1206 = vsub.s32 0, %v1205
      %v1207 = vrot.slane %v1079, %v1206
      %v1240 = vadd.f32 %v754, %v1083
      %v1241 = vadd.f32 %v757, %v1087
      %v1242 = vadd.f32 %v762, %v1091
      %v1243 = vadd.f32 %v765, %v1095
      %v1244 = vadd.f32 %v770, %v1099
      %v1245 = vadd.f32 %v773, %v1103
      %v1246 = vadd.f32 %v778, %v1107
      %v1247 = vadd.f32 %v781, %v1111
      %v1248 = vadd.f32 %v786, %v1115
      %v1249 = vadd.f32 %v789, %v1119
      %v1250 = vadd.f32 %v794, %v1123
      %v1251 = vadd.f32 %v797, %v1127
      %v1252 = vadd.f32 %v802, %v1131
      %v1253 = vadd.f32 %v805, %v1135
      %v1254 = vadd.f32 %v810, %v1139
      %v1255 = vadd.f32 %v813, %v1143
      %v1256 = vadd.f32 %v818, %v1147
      %v1257 = vadd.f32 %v821, %v1151
      %v1258 = vadd.f32 %v826, %v1155
      %v1259 = vadd.f32 %v829, %v1159
      %v1260 = vadd.f32 %v834, %v1163
      %v1261 = vadd.f32 %v837, %v1167
      %v1262 = vadd.f32 %v842, %v1171
      %v1263 = vadd.f32 %v845, %v1175
      %v1264 = vadd.f32 %v850, %v1179
      %v1265 = vadd.f32 %v853, %v1183
      %v1266 = vadd.f32 %v858, %v1187
      %v1267 = vadd.f32 %v861, %v1191
      %v1268 = vadd.f32 %v866, %v1195
      %v1269 = vadd.f32 %v869, %v1199
      %v1270 = vadd.f32 %v874, %v1203
      %v1271 = vadd.f32 %v877, %v1207
      %v1272 = vmax.f32 %v1240, 0.0
      %v1273 = vmax.f32 %v1241, 0.0
      %v1274 = vmax.f32 %v1242, 0.0
      %v1275 = vmax.f32 %v1243, 0.0
      %v1276 = vmax.f32 %v1244, 0.0
      %v1277 = vmax.f32 %v1245, 0.0
      %v1278 = vmax.f32 %v1246, 0.0
      %v1279 = vmax.f32 %v1247, 0.0
      %v1280 = vmax.f32 %v1248, 0.0
      %v1281 = vmax.f32 %v1249, 0.0
      %v1282 = vmax.f32 %v1250, 0.0
      %v1283 = vmax.f32 %v1251, 0.0
      %v1284 = vmax.f32 %v1252, 0.0
      %v1285 = vmax.f32 %v1253, 0.0
      %v1286 = vmax.f32 %v1254, 0.0
      %v1287 = vmax.f32 %v1255, 0.0
      %v1288 = vmax.f32 %v1256, 0.0
      %v1289 = vmax.f32 %v1257, 0.0
      %v1290 = vmax.f32 %v1258, 0.0
      %v1291 = vmax.f32 %v1259, 0.0
      %v1292 = vmax.f32 %v1260, 0.0
      %v1293 = vmax.f32 %v1261, 0.0
      %v1294 = vmax.f32 %v1262, 0.0
      %v1295 = vmax.f32 %v1263, 0.0
      %v1296 = vmax.f32 %v1264, 0.0
      %v1297 = vmax.f32 %v1265, 0.0
      %v1298 = vmax.f32 %v1266, 0.0
      %v1299 = vmax.f32 %v1267, 0.0
      %v1300 = vmax.f32 %v1268, 0.0
      %v1301 = vmax.f32 %v1269, 0.0
      %v1302 = vmax.f32 %v1270, 0.0
      %v1303 = vmax.f32 %v1271, 0.0
      %v1304 = vpack.c.bf16 %v1273, %v1272
      %v1305 = vpack.c.bf16 %v1275, %v1274
      %v1306 = vpack.c.bf16 %v1277, %v1276
      %v1307 = vpack.c.bf16 %v1279, %v1278
      %v1308 = vpack.c.bf16 %v1281, %v1280
      %v1309 = vpack.c.bf16 %v1283, %v1282
      %v1310 = vpack.c.bf16 %v1285, %v1284
      %v1311 = vpack.c.bf16 %v1287, %v1286
      %v1312 = vpack.c.bf16 %v1289, %v1288
      %v1313 = vpack.c.bf16 %v1291, %v1290
      %v1314 = vpack.c.bf16 %v1293, %v1292
      %v1315 = vpack.c.bf16 %v1295, %v1294
      %v1316 = vpack.c.bf16 %v1297, %v1296
      %v1317 = vpack.c.bf16 %v1299, %v1298
      %v1318 = vpack.c.bf16 %v1301, %v1300
      %v1319 = vpack.c.bf16 %v1303, %v1302
      %v1320 = vld [vmem:[%s6] sm:$0xf]
      %v1321 = vld [vmem:[%s6 + $0x4] sm:$0xf]
      %v1322 = vld [vmem:[%s6 + $0x8] sm:$0xf]
      %v1323 = vld [vmem:[%s6 + $0xc] sm:$0xf]
      %v1324 = vld [vmem:[%s6 + $0x10] sm:$0xf]
      %v1325 = vld [vmem:[%s6 + $0x14] sm:$0xf]
      %v1326 = vld [vmem:[%s6 + $0x18] sm:$0xf]
      %v1327 = vld [vmem:[%s6 + $0x1c] sm:$0xf]
      %v1328 = vld [vmem:[%s7] sm:$0x1]
      %v1330 = vlaneseq
      %v1331 = vshrl.u32 %v1330, 7
      %v1332 = vsub.s32 0, %v1331
      %v1333 = vrot.slane %v1328, %v1332
      %v1343 = vunpack.c.l.b16 %v1320
      %v1344 = vunpack.c.l.b16 %v1321
      %v1345 = vunpack.c.l.b16 %v1322
      %v1346 = vunpack.c.l.b16 %v1323
      %v1347 = vunpack.c.l.b16 %v1324
      %v1348 = vunpack.c.l.b16 %v1325
      %v1349 = vunpack.c.l.b16 %v1326
      %v1350 = vunpack.c.l.b16 %v1327
      %v1351 = vpack.c.b16 %v1344, %v1343
      %v1352 = vpack.c.b16 %v1346, %v1345
      %v1353 = vpack.c.b16 %v1348, %v1347
      %v1354 = vpack.c.b16 %v1350, %v1349
      %v1360 = vsel %vm567, %v1304, 0
      %v1363 = vsel %vm567, %v1305, 0
      %v1366 = vsel %vm567, %v1306, 0
      %v1369 = vsel %vm567, %v1307, 0
      %v1372 = vsel %vm567, %v1308, 0
      %v1375 = vsel %vm567, %v1309, 0
      %v1378 = vsel %vm567, %v1310, 0
      %v1381 = vsel %vm567, %v1311, 0
      %v1384 = vsel %vm567, %v1312, 0
      %v1387 = vsel %vm567, %v1313, 0
      %v1390 = vsel %vm567, %v1314, 0
      %v1393 = vsel %vm567, %v1315, 0
      %v1396 = vsel %vm567, %v1316, 0
      %v1399 = vsel %vm567, %v1317, 0
      %v1402 = vsel %vm567, %v1318, 0
      %v1405 = vsel %vm567, %v1319, 0
      %1407 = vmatprep.subr.bf16.mxu0 0
      %1408 = vmatpush1.bf16.msra.mxu0 0
      %1409 = vmatprep.subr.bf16.mxu0 0
      %1410 = vmatpush1.bf16.msra.mxu0 0
      %1411 = vmatprep.subr.bf16.mxu0 0
      %1412 = vmatpush1.bf16.msra.mxu0 0
      %1413 = vmatprep.subr.bf16.mxu0 0
      %1414 = vmatpush1.bf16.msra.mxu0 0
      %1415 = vmatprep.subr.bf16.mxu0 0
      %1416 = vmatpush1.bf16.msra.mxu0 %v1354
      %1417 = vmatprep.subr.bf16.mxu0 0
      %1418 = vmatpush1.bf16.msra.mxu0 %v1353
      %1419 = vmatprep.subr.bf16.mxu0 0
      %1420 = vmatpush1.bf16.msra.mxu0 %v1352
      %1421 = vmatprep.subr.bf16.mxu0 0
      %1422 = vmatpush1.bf16.msra.mxu0 %v1351
      %1423 = vmatprep.subr.bf16.mxu0 0
      %1424 = vmatpush2.bf16.msra.mxu0 0
      %1425 = vmatprep.subr.bf16.mxu0 0
      %1426 = vmatpush2.bf16.msra.mxu0 0
      %1427 = vmatprep.subr.bf16.mxu0 0
      %1428 = vmatpush2.bf16.msra.mxu0 0
      %1429 = vmatprep.subr.bf16.mxu0 0
      %1430 = vmatpush2.bf16.msra.mxu0 0
      %1431 = vmatprep.subr.bf16.mxu0 0
      %1432 = vmatpush2.bf16.msra.mxu0 0
      %1433 = vmatprep.subr.bf16.mxu0 0
      %1434 = vmatpush2.bf16.msra.mxu0 0
      %1435 = vmatprep.subr.bf16.mxu0 0
      %1436 = vmatpush2.bf16.msra.mxu0 0
      %1437 = vmatprep.subr.bf16.mxu0 0
      %1438 = vmatpush2.bf16.msra.mxu0 0
      %1439 = vmatprep.mubr.bf16.mxu0 0
      %1440 = vmatmul.mubr.bf16.gmra.mxu0 %v1360
      %v1441 = vpop.f32.mrf.mxu0
      %v1442 = vadd.f32 %v1333, %v1441
      %v1443 = vpop.f32.mrf.mxu0
      %v1444 = vpop.f32.mrf.mxu0
      %v1445 = vadd.f32 %v1333, %v1444
      %v1446 = vpop.f32.mrf.mxu0
      %1447 = vmatprep.mubr.bf16.mxu0 0
      %1448 = vmatmul.mubr.bf16.gmra.mxu0 %v1363
      %v1449 = vpop.f32.mrf.mxu0
      %v1450 = vadd.f32 %v1333, %v1449
      %v1451 = vpop.f32.mrf.mxu0
      %v1452 = vpop.f32.mrf.mxu0
      %v1453 = vadd.f32 %v1333, %v1452
      %v1454 = vpop.f32.mrf.mxu0
      %1455 = vmatprep.mubr.bf16.mxu0 0
      %1456 = vmatmul.mubr.bf16.gmra.mxu0 %v1366
      %v1457 = vpop.f32.mrf.mxu0
      %v1458 = vadd.f32 %v1333, %v1457
      %v1459 = vpop.f32.mrf.mxu0
      %v1460 = vpop.f32.mrf.mxu0
      %v1461 = vadd.f32 %v1333, %v1460
      %v1462 = vpop.f32.mrf.mxu0
      %1463 = vmatprep.mubr.bf16.mxu0 0
      %1464 = vmatmul.mubr.bf16.gmra.mxu0 %v1369
      %v1465 = vpop.f32.mrf.mxu0
      %v1466 = vadd.f32 %v1333, %v1465
      %v1467 = vpop.f32.mrf.mxu0
      %v1468 = vpop.f32.mrf.mxu0
      %v1469 = vadd.f32 %v1333, %v1468
      %v1470 = vpop.f32.mrf.mxu0
      %1471 = vmatprep.mubr.bf16.mxu0 0
      %1472 = vmatmul.mubr.bf16.gmra.mxu0 %v1372
      %v1473 = vpop.f32.mrf.mxu0
      %v1474 = vadd.f32 %v1333, %v1473
      %v1475 = vpop.f32.mrf.mxu0
      %v1476 = vpop.f32.mrf.mxu0
      %v1477 = vadd.f32 %v1333, %v1476
      %v1478 = vpop.f32.mrf.mxu0
      %1479 = vmatprep.mubr.bf16.mxu0 0
      %1480 = vmatmul.mubr.bf16.gmra.mxu0 %v1375
      %v1481 = vpop.f32.mrf.mxu0
      %v1482 = vadd.f32 %v1333, %v1481
      %v1483 = vpop.f32.mrf.mxu0
      %v1484 = vpop.f32.mrf.mxu0
      %v1485 = vadd.f32 %v1333, %v1484
      %v1486 = vpop.f32.mrf.mxu0
      %1487 = vmatprep.mubr.bf16.mxu0 0
      %1488 = vmatmul.mubr.bf16.gmra.mxu0 %v1378
      %v1489 = vpop.f32.mrf.mxu0
      %v1490 = vadd.f32 %v1333, %v1489
      %v1491 = vpop.f32.mrf.mxu0
      %v1492 = vpop.f32.mrf.mxu0
      %v1493 = vadd.f32 %v1333, %v1492
      %v1494 = vpop.f32.mrf.mxu0
      %1495 = vmatprep.mubr.bf16.mxu0 0
      %1496 = vmatmul.mubr.bf16.gmra.mxu0 %v1381
      %v1497 = vpop.f32.mrf.mxu0
      %v1498 = vadd.f32 %v1333, %v1497
      %v1499 = vpop.f32.mrf.mxu0
      %v1500 = vpop.f32.mrf.mxu0
      %v1501 = vadd.f32 %v1333, %v1500
      %v1502 = vpop.f32.mrf.mxu0
      %1503 = vmatprep.mubr.bf16.mxu0 0
      %1504 = vmatmul.mubr.bf16.gmra.mxu0 %v1384
      %v1505 = vpop.f32.mrf.mxu0
      %v1506 = vadd.f32 %v1333, %v1505
      %v1507 = vpop.f32.mrf.mxu0
      %v1508 = vpop.f32.mrf.mxu0
      %v1509 = vadd.f32 %v1333, %v1508
      %v1510 = vpop.f32.mrf.mxu0
      %1511 = vmatprep.mubr.bf16.mxu0 0
      %1512 = vmatmul.mubr.bf16.gmra.mxu0 %v1387
      %v1513 = vpop.f32.mrf.mxu0
      %v1514 = vadd.f32 %v1333, %v1513
      %v1515 = vpop.f32.mrf.mxu0
      %v1516 = vpop.f32.mrf.mxu0
      %v1517 = vadd.f32 %v1333, %v1516
      %v1518 = vpop.f32.mrf.mxu0
      %1519 = vmatprep.mubr.bf16.mxu0 0
      %1520 = vmatmul.mubr.bf16.gmra.mxu0 %v1390
      %v1521 = vpop.f32.mrf.mxu0
      %v1522 = vadd.f32 %v1333, %v1521
      %v1523 = vpop.f32.mrf.mxu0
      %v1524 = vpop.f32.mrf.mxu0
      %v1525 = vadd.f32 %v1333, %v1524
      %v1526 = vpop.f32.mrf.mxu0
      %1527 = vmatprep.mubr.bf16.mxu0 0
      %1528 = vmatmul.mubr.bf16.gmra.mxu0 %v1393
      %v1529 = vpop.f32.mrf.mxu0
      %v1530 = vadd.f32 %v1333, %v1529
      %v1531 = vpop.f32.mrf.mxu0
      %v1532 = vpop.f32.mrf.mxu0
      %v1533 = vadd.f32 %v1333, %v1532
      %v1534 = vpop.f32.mrf.mxu0
      %1535 = vmatprep.mubr.bf16.mxu0 0
      %1536 = vmatmul.mubr.bf16.gmra.mxu0 %v1396
      %v1537 = vpop.f32.mrf.mxu0
      %v1538 = vadd.f32 %v1333, %v1537
      %v1539 = vpop.f32.mrf.mxu0
      %v1540 = vpop.f32.mrf.mxu0
      %v1541 = vadd.f32 %v1333, %v1540
      %v1542 = vpop.f32.mrf.mxu0
      %1543 = vmatprep.mubr.bf16.mxu0 0
      %1544 = vmatmul.mubr.bf16.gmra.mxu0 %v1399
      %v1545 = vpop.f32.mrf.mxu0
      %v1546 = vadd.f32 %v1333, %v1545
      %v1547 = vpop.f32.mrf.mxu0
      %v1548 = vpop.f32.mrf.mxu0
      %v1549 = vadd.f32 %v1333, %v1548
      %v1550 = vpop.f32.mrf.mxu0
      %1551 = vmatprep.mubr.bf16.mxu0 0
      %1552 = vmatmul.mubr.bf16.gmra.mxu0 %v1402
      %v1553 = vpop.f32.mrf.mxu0
      %v1554 = vadd.f32 %v1333, %v1553
      %v1555 = vpop.f32.mrf.mxu0
      %v1556 = vpop.f32.mrf.mxu0
      %v1557 = vadd.f32 %v1333, %v1556
      %v1558 = vpop.f32.mrf.mxu0
      %1559 = vmatprep.mubr.bf16.mxu0 0
      %1560 = vmatmul.mubr.bf16.gmra.mxu0 %v1405
      %v1561 = vpop.f32.mrf.mxu0
      %v1562 = vadd.f32 %v1333, %v1561
      %v1563 = vpop.f32.mrf.mxu0
      %v1564 = vpop.f32.mrf.mxu0
      %v1565 = vadd.f32 %v1333, %v1564
      %v1566 = vpop.f32.mrf.mxu0
      %1567 = vdwg.mxu0
      %v1568 = vld [vmem:[%s342] sm:$0xff]
      %v1569 = vld [vmem:[%s342 + $0x8] sm:$0xff]
      %v1570 = vld [vmem:[%s342 + $0x10] sm:$0xff]
      %v1571 = vld [vmem:[%s342 + $0x18] sm:$0xff]
      %v1572 = vld [vmem:[%s342 + $0x20] sm:$0xff]
      %v1573 = vld [vmem:[%s342 + $0x28] sm:$0xff]
      %v1574 = vld [vmem:[%s342 + $0x30] sm:$0xff]
      %v1575 = vld [vmem:[%s342 + $0x38] sm:$0xff]
      %v1576 = vld [vmem:[%s342 + $0x40] sm:$0xff]
      %v1577 = vld [vmem:[%s342 + $0x48] sm:$0xff]
      %v1578 = vld [vmem:[%s342 + $0x50] sm:$0xff]
      %v1579 = vld [vmem:[%s342 + $0x58] sm:$0xff]
      %v1580 = vld [vmem:[%s342 + $0x60] sm:$0xff]
      %v1581 = vld [vmem:[%s342 + $0x68] sm:$0xff]
      %v1582 = vld [vmem:[%s342 + $0x70] sm:$0xff]
      %v1583 = vld [vmem:[%s342 + $0x78] sm:$0xff]
      %v1584 = vld [vmem:[%s342 + $0x80] sm:$0xff]
      %v1585 = vld [vmem:[%s342 + $0x88] sm:$0xff]
      %v1586 = vld [vmem:[%s342 + $0x90] sm:$0xff]
      %v1587 = vld [vmem:[%s342 + $0x98] sm:$0xff]
      %v1588 = vld [vmem:[%s342 + $0xa0] sm:$0xff]
      %v1589 = vld [vmem:[%s342 + $0xa8] sm:$0xff]
      %v1590 = vld [vmem:[%s342 + $0xb0] sm:$0xff]
      %v1591 = vld [vmem:[%s342 + $0xb8] sm:$0xff]
      %v1592 = vld [vmem:[%s342 + $0xc0] sm:$0xff]
      %v1593 = vld [vmem:[%s342 + $0xc8] sm:$0xff]
      %v1594 = vld [vmem:[%s342 + $0xd0] sm:$0xff]
      %v1595 = vld [vmem:[%s342 + $0xd8] sm:$0xff]
      %v1596 = vld [vmem:[%s342 + $0xe0] sm:$0xff]
      %v1597 = vld [vmem:[%s342 + $0xe8] sm:$0xff]
      %v1598 = vld [vmem:[%s342 + $0xf0] sm:$0xff]
      %v1599 = vld [vmem:[%s342 + $0xf8] sm:$0xff]
      %v1604 = vcombine.high %v358, %v358
      %v1606 = vunpack.c.l.s4 1966171168
      %v1607 = vunpack.c.0.s8 %v1606
      %v1608 = vlaneseq
      %v1609 = vshrl.u32 %v1608, 7
      %v1610 = vsub.s32 %v1607, %v1609
      %v1611 = vrot.slane %v358, %v1610
      %v1613 = vunpack.c.l.s4 1966171168
      %v1614 = vunpack.c.0.s8 %v1613
      %v1615 = vlaneseq
      %v1616 = vshrl.u32 %v1615, 7
      %v1617 = vsub.s32 %v1614, %v1616
      %v1618 = vrot.slane %v1604, %v1617
      %v1619 = vcombine.high %v1611, %v1611
      %v1620 = vcombine.high %v1618, %v1618
      %v1622 = vunpack.c.l.s4 1966171168
      %v1623 = vunpack.c.0.s8 %v1622
      %v1624 = vlaneseq
      %v1625 = vshrl.u32 %v1624, 7
      %v1626 = vsub.s32 %v1623, %v1625
      %v1627 = vrot.slane %v1611, %v1626
      %v1629 = vunpack.c.l.s4 1966171168
      %v1630 = vunpack.c.0.s8 %v1629
      %v1631 = vlaneseq
      %v1632 = vshrl.u32 %v1631, 7
      %v1633 = vsub.s32 %v1630, %v1632
      %v1634 = vrot.slane %v1618, %v1633
      %v1636 = vunpack.c.l.s4 1966171168
      %v1637 = vunpack.c.0.s8 %v1636
      %v1638 = vlaneseq
      %v1639 = vshrl.u32 %v1638, 7
      %v1640 = vsub.s32 %v1637, %v1639
      %v1641 = vrot.slane %v1619, %v1640
      %v1643 = vunpack.c.l.s4 1966171168
      %v1644 = vunpack.c.0.s8 %v1643
      %v1645 = vlaneseq
      %v1646 = vshrl.u32 %v1645, 7
      %v1647 = vsub.s32 %v1644, %v1646
      %v1648 = vrot.slane %v1620, %v1647
      %v1649 = vcombine.high %v1627, %v1627
      %v1650 = vcombine.high %v1634, %v1634
      %v1651 = vcombine.high %v1641, %v1641
      %v1652 = vcombine.high %v1648, %v1648
      %v1653 = vcombine.high %v360, %v360
      %v1655 = vunpack.c.l.s4 1966171168
      %v1656 = vunpack.c.0.s8 %v1655
      %v1657 = vlaneseq
      %v1658 = vshrl.u32 %v1657, 7
      %v1659 = vsub.s32 %v1656, %v1658
      %v1660 = vrot.slane %v360, %v1659
      %v1662 = vunpack.c.l.s4 1966171168
      %v1663 = vunpack.c.0.s8 %v1662
      %v1664 = vlaneseq
      %v1665 = vshrl.u32 %v1664, 7
      %v1666 = vsub.s32 %v1663, %v1665
      %v1667 = vrot.slane %v1653, %v1666
      %v1668 = vcombine.high %v1660, %v1660
      %v1669 = vcombine.high %v1667, %v1667
      %v1671 = vunpack.c.l.s4 1966171168
      %v1672 = vunpack.c.0.s8 %v1671
      %v1673 = vlaneseq
      %v1674 = vshrl.u32 %v1673, 7
      %v1675 = vsub.s32 %v1672, %v1674
      %v1676 = vrot.slane %v1660, %v1675
      %v1678 = vunpack.c.l.s4 1966171168
      %v1679 = vunpack.c.0.s8 %v1678
      %v1680 = vlaneseq
      %v1681 = vshrl.u32 %v1680, 7
      %v1682 = vsub.s32 %v1679, %v1681
      %v1683 = vrot.slane %v1667, %v1682
      %v1685 = vunpack.c.l.s4 1966171168
      %v1686 = vunpack.c.0.s8 %v1685
      %v1687 = vlaneseq
      %v1688 = vshrl.u32 %v1687, 7
      %v1689 = vsub.s32 %v1686, %v1688
      %v1690 = vrot.slane %v1668, %v1689
      %v1692 = vunpack.c.l.s4 1966171168
      %v1693 = vunpack.c.0.s8 %v1692
      %v1694 = vlaneseq
      %v1695 = vshrl.u32 %v1694, 7
      %v1696 = vsub.s32 %v1693, %v1695
      %v1697 = vrot.slane %v1669, %v1696
      %v1698 = vcombine.high %v1676, %v1676
      %v1699 = vcombine.high %v1683, %v1683
      %v1700 = vcombine.high %v1690, %v1690
      %v1701 = vcombine.high %v1697, %v1697
      %v1702 = vcombine.high %v362, %v362
      %v1704 = vunpack.c.l.s4 1966171168
      %v1705 = vunpack.c.0.s8 %v1704
      %v1706 = vlaneseq
      %v1707 = vshrl.u32 %v1706, 7
      %v1708 = vsub.s32 %v1705, %v1707
      %v1709 = vrot.slane %v362, %v1708
      %v1711 = vunpack.c.l.s4 1966171168
      %v1712 = vunpack.c.0.s8 %v1711
      %v1713 = vlaneseq
      %v1714 = vshrl.u32 %v1713, 7
      %v1715 = vsub.s32 %v1712, %v1714
      %v1716 = vrot.slane %v1702, %v1715
      %v1717 = vcombine.high %v1709, %v1709
      %v1718 = vcombine.high %v1716, %v1716
      %v1720 = vunpack.c.l.s4 1966171168
      %v1721 = vunpack.c.0.s8 %v1720
      %v1722 = vlaneseq
      %v1723 = vshrl.u32 %v1722, 7
      %v1724 = vsub.s32 %v1721, %v1723
      %v1725 = vrot.slane %v1709, %v1724
      %v1727 = vunpack.c.l.s4 1966171168
      %v1728 = vunpack.c.0.s8 %v1727
      %v1729 = vlaneseq
      %v1730 = vshrl.u32 %v1729, 7
      %v1731 = vsub.s32 %v1728, %v1730
      %v1732 = vrot.slane %v1716, %v1731
      %v1734 = vunpack.c.l.s4 1966171168
      %v1735 = vunpack.c.0.s8 %v1734
      %v1736 = vlaneseq
      %v1737 = vshrl.u32 %v1736, 7
      %v1738 = vsub.s32 %v1735, %v1737
      %v1739 = vrot.slane %v1717, %v1738
      %v1741 = vunpack.c.l.s4 1966171168
      %v1742 = vunpack.c.0.s8 %v1741
      %v1743 = vlaneseq
      %v1744 = vshrl.u32 %v1743, 7
      %v1745 = vsub.s32 %v1742, %v1744
      %v1746 = vrot.slane %v1718, %v1745
      %v1747 = vcombine.high %v1725, %v1725
      %v1748 = vcombine.high %v1732, %v1732
      %v1749 = vcombine.high %v1739, %v1739
      %v1750 = vcombine.high %v1746, %v1746
      %v1751 = vcombine.high %v364, %v364
      %v1753 = vunpack.c.l.s4 1966171168
      %v1754 = vunpack.c.0.s8 %v1753
      %v1755 = vlaneseq
      %v1756 = vshrl.u32 %v1755, 7
      %v1757 = vsub.s32 %v1754, %v1756
      %v1758 = vrot.slane %v364, %v1757
      %v1760 = vunpack.c.l.s4 1966171168
      %v1761 = vunpack.c.0.s8 %v1760
      %v1762 = vlaneseq
      %v1763 = vshrl.u32 %v1762, 7
      %v1764 = vsub.s32 %v1761, %v1763
      %v1765 = vrot.slane %v1751, %v1764
      %v1766 = vcombine.high %v1758, %v1758
      %v1767 = vcombine.high %v1765, %v1765
      %v1769 = vunpack.c.l.s4 1966171168
      %v1770 = vunpack.c.0.s8 %v1769
      %v1771 = vlaneseq
      %v1772 = vshrl.u32 %v1771, 7
      %v1773 = vsub.s32 %v1770, %v1772
      %v1774 = vrot.slane %v1758, %v1773
      %v1776 = vunpack.c.l.s4 1966171168
      %v1777 = vunpack.c.0.s8 %v1776
      %v1778 = vlaneseq
      %v1779 = vshrl.u32 %v1778, 7
      %v1780 = vsub.s32 %v1777, %v1779
      %v1781 = vrot.slane %v1765, %v1780
      %v1783 = vunpack.c.l.s4 1966171168
      %v1784 = vunpack.c.0.s8 %v1783
      %v1785 = vlaneseq
      %v1786 = vshrl.u32 %v1785, 7
      %v1787 = vsub.s32 %v1784, %v1786
      %v1788 = vrot.slane %v1766, %v1787
      %v1790 = vunpack.c.l.s4 1966171168
      %v1791 = vunpack.c.0.s8 %v1790
      %v1792 = vlaneseq
      %v1793 = vshrl.u32 %v1792, 7
      %v1794 = vsub.s32 %v1791, %v1793
      %v1795 = vrot.slane %v1767, %v1794
      %v1796 = vcombine.high %v1774, %v1774
      %v1797 = vcombine.high %v1781, %v1781
      %v1798 = vcombine.high %v1788, %v1788
      %v1799 = vcombine.high %v1795, %v1795
      %v1800 = vlaneseq
      %v1801 = vshrl.u32 %v1800, 7
      %v1802 = vsub.s32 0, %v1801
      %v1803 = vrot.slane %v1627, %v1802
      %v1804 = vlaneseq
      %v1805 = vshrl.u32 %v1804, 7
      %v1806 = vsub.s32 0, %v1805
      %v1807 = vrot.slane %v1641, %v1806
      %v1808 = vlaneseq
      %v1809 = vshrl.u32 %v1808, 7
      %v1810 = vsub.s32 0, %v1809
      %v1811 = vrot.slane %v1649, %v1810
      %v1812 = vlaneseq
      %v1813 = vshrl.u32 %v1812, 7
      %v1814 = vsub.s32 0, %v1813
      %v1815 = vrot.slane %v1651, %v1814
      %v1816 = vlaneseq
      %v1817 = vshrl.u32 %v1816, 7
      %v1818 = vsub.s32 0, %v1817
      %v1819 = vrot.slane %v1634, %v1818
      %v1820 = vlaneseq
      %v1821 = vshrl.u32 %v1820, 7
      %v1822 = vsub.s32 0, %v1821
      %v1823 = vrot.slane %v1648, %v1822
      %v1824 = vlaneseq
      %v1825 = vshrl.u32 %v1824, 7
      %v1826 = vsub.s32 0, %v1825
      %v1827 = vrot.slane %v1650, %v1826
      %v1828 = vlaneseq
      %v1829 = vshrl.u32 %v1828, 7
      %v1830 = vsub.s32 0, %v1829
      %v1831 = vrot.slane %v1652, %v1830
      %v1832 = vlaneseq
      %v1833 = vshrl.u32 %v1832, 7
      %v1834 = vsub.s32 0, %v1833
      %v1835 = vrot.slane %v1676, %v1834
      %v1836 = vlaneseq
      %v1837 = vshrl.u32 %v1836, 7
      %v1838 = vsub.s32 0, %v1837
      %v1839 = vrot.slane %v1690, %v1838
      %v1840 = vlaneseq
      %v1841 = vshrl.u32 %v1840, 7
      %v1842 = vsub.s32 0, %v1841
      %v1843 = vrot.slane %v1698, %v1842
      %v1844 = vlaneseq
      %v1845 = vshrl.u32 %v1844, 7
      %v1846 = vsub.s32 0, %v1845
      %v1847 = vrot.slane %v1700, %v1846
      %v1848 = vlaneseq
      %v1849 = vshrl.u32 %v1848, 7
      %v1850 = vsub.s32 0, %v1849
      %v1851 = vrot.slane %v1683, %v1850
      %v1852 = vlaneseq
      %v1853 = vshrl.u32 %v1852, 7
      %v1854 = vsub.s32 0, %v1853
      %v1855 = vrot.slane %v1697, %v1854
      %v1856 = vlaneseq
      %v1857 = vshrl.u32 %v1856, 7
      %v1858 = vsub.s32 0, %v1857
      %v1859 = vrot.slane %v1699, %v1858
      %v1860 = vlaneseq
      %v1861 = vshrl.u32 %v1860, 7
      %v1862 = vsub.s32 0, %v1861
      %v1863 = vrot.slane %v1701, %v1862
      %v1864 = vlaneseq
      %v1865 = vshrl.u32 %v1864, 7
      %v1866 = vsub.s32 0, %v1865
      %v1867 = vrot.slane %v1725, %v1866
      %v1868 = vlaneseq
      %v1869 = vshrl.u32 %v1868, 7
      %v1870 = vsub.s32 0, %v1869
      %v1871 = vrot.slane %v1739, %v1870
      %v1872 = vlaneseq
      %v1873 = vshrl.u32 %v1872, 7
      %v1874 = vsub.s32 0, %v1873
      %v1875 = vrot.slane %v1747, %v1874
      %v1876 = vlaneseq
      %v1877 = vshrl.u32 %v1876, 7
      %v1878 = vsub.s32 0, %v1877
      %v1879 = vrot.slane %v1749, %v1878
      %v1880 = vlaneseq
      %v1881 = vshrl.u32 %v1880, 7
      %v1882 = vsub.s32 0, %v1881
      %v1883 = vrot.slane %v1732, %v1882
      %v1884 = vlaneseq
      %v1885 = vshrl.u32 %v1884, 7
      %v1886 = vsub.s32 0, %v1885
      %v1887 = vrot.slane %v1746, %v1886
      %v1888 = vlaneseq
      %v1889 = vshrl.u32 %v1888, 7
      %v1890 = vsub.s32 0, %v1889
      %v1891 = vrot.slane %v1748, %v1890
      %v1892 = vlaneseq
      %v1893 = vshrl.u32 %v1892, 7
      %v1894 = vsub.s32 0, %v1893
      %v1895 = vrot.slane %v1750, %v1894
      %v1896 = vlaneseq
      %v1897 = vshrl.u32 %v1896, 7
      %v1898 = vsub.s32 0, %v1897
      %v1899 = vrot.slane %v1774, %v1898
      %v1900 = vlaneseq
      %v1901 = vshrl.u32 %v1900, 7
      %v1902 = vsub.s32 0, %v1901
      %v1903 = vrot.slane %v1788, %v1902
      %v1904 = vlaneseq
      %v1905 = vshrl.u32 %v1904, 7
      %v1906 = vsub.s32 0, %v1905
      %v1907 = vrot.slane %v1796, %v1906
      %v1908 = vlaneseq
      %v1909 = vshrl.u32 %v1908, 7
      %v1910 = vsub.s32 0, %v1909
      %v1911 = vrot.slane %v1798, %v1910
      %v1912 = vlaneseq
      %v1913 = vshrl.u32 %v1912, 7
      %v1914 = vsub.s32 0, %v1913
      %v1915 = vrot.slane %v1781, %v1914
      %v1916 = vlaneseq
      %v1917 = vshrl.u32 %v1916, 7
      %v1918 = vsub.s32 0, %v1917
      %v1919 = vrot.slane %v1795, %v1918
      %v1920 = vlaneseq
      %v1921 = vshrl.u32 %v1920, 7
      %v1922 = vsub.s32 0, %v1921
      %v1923 = vrot.slane %v1797, %v1922
      %v1924 = vlaneseq
      %v1925 = vshrl.u32 %v1924, 7
      %v1926 = vsub.s32 0, %v1925
      %v1927 = vrot.slane %v1799, %v1926
      %v1960 = vmul.f32 %v1803, %v494
      %v1961 = vmul.f32 %v1807, %v495
      %v1962 = vmul.f32 %v1811, %v496
      %v1963 = vmul.f32 %v1815, %v497
      %v1964 = vmul.f32 %v1819, %v498
      %v1965 = vmul.f32 %v1823, %v499
      %v1966 = vmul.f32 %v1827, %v500
      %v1967 = vmul.f32 %v1831, %v501
      %v1968 = vmul.f32 %v1835, %v502
      %v1969 = vmul.f32 %v1839, %v503
      %v1970 = vmul.f32 %v1843, %v504
      %v1971 = vmul.f32 %v1847, %v505
      %v1972 = vmul.f32 %v1851, %v506
      %v1973 = vmul.f32 %v1855, %v507
      %v1974 = vmul.f32 %v1859, %v508
      %v1975 = vmul.f32 %v1863, %v509
      %v1976 = vmul.f32 %v1867, %v510
      %v1977 = vmul.f32 %v1871, %v511
      %v1978 = vmul.f32 %v1875, %v512
      %v1979 = vmul.f32 %v1879, %v513
      %v1980 = vmul.f32 %v1883, %v514
      %v1981 = vmul.f32 %v1887, %v515
      %v1982 = vmul.f32 %v1891, %v516
      %v1983 = vmul.f32 %v1895, %v517
      %v1984 = vmul.f32 %v1899, %v518
      %v1985 = vmul.f32 %v1903, %v519
      %v1986 = vmul.f32 %v1907, %v520
      %v1987 = vmul.f32 %v1911, %v521
      %v1988 = vmul.f32 %v1915, %v522
      %v1989 = vmul.f32 %v1919, %v523
      %v1990 = vmul.f32 %v1923, %v524
      %v1991 = vmul.f32 %v1927, %v525
      %2024 = vrot.lane.b32.xlu0 %v1960, 96
      %v2025 = vpop.permute.xlu0 %2024
      %2026 = vrot.lane.b32.xlu0 %v1961, 96
      %v2027 = vpop.permute.xlu0 %2026
      %2028 = vrot.lane.b32.xlu0 %v1962, 96
      %v2029 = vpop.permute.xlu0 %2028
      %2030 = vrot.lane.b32.xlu0 %v1963, 96
      %v2031 = vpop.permute.xlu0 %2030
      %2032 = vrot.lane.b32.xlu0 %v1964, 96
      %v2033 = vpop.permute.xlu0 %2032
      %2034 = vrot.lane.b32.xlu0 %v1965, 96
      %v2035 = vpop.permute.xlu0 %2034
      %2036 = vrot.lane.b32.xlu0 %v1966, 96
      %v2037 = vpop.permute.xlu0 %2036
      %2038 = vrot.lane.b32.xlu0 %v1967, 96
      %v2039 = vpop.permute.xlu0 %2038
      %2040 = vrot.lane.b32.xlu0 %v1968, 96
      %v2041 = vpop.permute.xlu0 %2040
      %2042 = vrot.lane.b32.xlu0 %v1969, 96
      %v2043 = vpop.permute.xlu0 %2042
      %2044 = vrot.lane.b32.xlu0 %v1970, 96
      %v2045 = vpop.permute.xlu0 %2044
      %2046 = vrot.lane.b32.xlu0 %v1971, 96
      %v2047 = vpop.permute.xlu0 %2046
      %2048 = vrot.lane.b32.xlu0 %v1972, 96
      %v2049 = vpop.permute.xlu0 %2048
      %2050 = vrot.lane.b32.xlu0 %v1973, 96
      %v2051 = vpop.permute.xlu0 %2050
      %2052 = vrot.lane.b32.xlu0 %v1974, 96
      %v2053 = vpop.permute.xlu0 %2052
      %2054 = vrot.lane.b32.xlu0 %v1975, 96
      %v2055 = vpop.permute.xlu0 %2054
      %2056 = vrot.lane.b32.xlu0 %v1976, 96
      %v2057 = vpop.permute.xlu0 %2056
      %2058 = vrot.lane.b32.xlu0 %v1977, 96
      %v2059 = vpop.permute.xlu0 %2058
      %2060 = vrot.lane.b32.xlu0 %v1978, 96
      %v2061 = vpop.permute.xlu0 %2060
      %2062 = vrot.lane.b32.xlu0 %v1979, 96
      %v2063 = vpop.permute.xlu0 %2062
      %2064 = vrot.lane.b32.xlu0 %v1980, 96
      %v2065 = vpop.permute.xlu0 %2064
      %2066 = vrot.lane.b32.xlu0 %v1981, 96
      %v2067 = vpop.permute.xlu0 %2066
      %2068 = vrot.lane.b32.xlu0 %v1982, 96
      %v2069 = vpop.permute.xlu0 %2068
      %2070 = vrot.lane.b32.xlu0 %v1983, 96
      %v2071 = vpop.permute.xlu0 %2070
      %2072 = vrot.lane.b32.xlu0 %v1984, 96
      %v2073 = vpop.permute.xlu0 %2072
      %2074 = vrot.lane.b32.xlu0 %v1985, 96
      %v2075 = vpop.permute.xlu0 %2074
      %2076 = vrot.lane.b32.xlu0 %v1986, 96
      %v2077 = vpop.permute.xlu0 %2076
      %2078 = vrot.lane.b32.xlu0 %v1987, 96
      %v2079 = vpop.permute.xlu0 %2078
      %2080 = vrot.lane.b32.xlu0 %v1988, 96
      %v2081 = vpop.permute.xlu0 %2080
      %2082 = vrot.lane.b32.xlu0 %v1989, 96
      %v2083 = vpop.permute.xlu0 %2082
      %2084 = vrot.lane.b32.xlu0 %v1990, 96
      %v2085 = vpop.permute.xlu0 %2084
      %2086 = vrot.lane.b32.xlu0 %v1991, 96
      %v2087 = vpop.permute.xlu0 %2086
      %v2120 = vsub.f32 %v1960, %v2025
      %v2121 = vsub.f32 %v1961, %v2027
      %v2122 = vsub.f32 %v1962, %v2029
      %v2123 = vsub.f32 %v1963, %v2031
      %v2124 = vsub.f32 %v1964, %v2033
      %v2125 = vsub.f32 %v1965, %v2035
      %v2126 = vsub.f32 %v1966, %v2037
      %v2127 = vsub.f32 %v1967, %v2039
      %v2128 = vsub.f32 %v1968, %v2041
      %v2129 = vsub.f32 %v1969, %v2043
      %v2130 = vsub.f32 %v1970, %v2045
      %v2131 = vsub.f32 %v1971, %v2047
      %v2132 = vsub.f32 %v1972, %v2049
      %v2133 = vsub.f32 %v1973, %v2051
      %v2134 = vsub.f32 %v1974, %v2053
      %v2135 = vsub.f32 %v1975, %v2055
      %v2136 = vsub.f32 %v1976, %v2057
      %v2137 = vsub.f32 %v1977, %v2059
      %v2138 = vsub.f32 %v1978, %v2061
      %v2139 = vsub.f32 %v1979, %v2063
      %v2140 = vsub.f32 %v1980, %v2065
      %v2141 = vsub.f32 %v1981, %v2067
      %v2142 = vsub.f32 %v1982, %v2069
      %v2143 = vsub.f32 %v1983, %v2071
      %v2144 = vsub.f32 %v1984, %v2073
      %v2145 = vsub.f32 %v1985, %v2075
      %v2146 = vsub.f32 %v1986, %v2077
      %v2147 = vsub.f32 %v1987, %v2079
      %v2148 = vsub.f32 %v1988, %v2081
      %v2149 = vsub.f32 %v1989, %v2083
      %v2150 = vsub.f32 %v1990, %v2085
      %v2151 = vsub.f32 %v1991, %v2087
      %v2152 = vsub.f32 %v1568, %v2120
      %v2153 = vsub.f32 %v1569, %v2121
      %v2154 = vsub.f32 %v1570, %v2122
      %v2155 = vsub.f32 %v1571, %v2123
      %v2156 = vsub.f32 %v1572, %v2124
      %v2157 = vsub.f32 %v1573, %v2125
      %v2158 = vsub.f32 %v1574, %v2126
      %v2159 = vsub.f32 %v1575, %v2127
      %v2160 = vsub.f32 %v1576, %v2128
      %v2161 = vsub.f32 %v1577, %v2129
      %v2162 = vsub.f32 %v1578, %v2130
      %v2163 = vsub.f32 %v1579, %v2131
      %v2164 = vsub.f32 %v1580, %v2132
      %v2165 = vsub.f32 %v1581, %v2133
      %v2166 = vsub.f32 %v1582, %v2134
      %v2167 = vsub.f32 %v1583, %v2135
      %v2168 = vsub.f32 %v1584, %v2136
      %v2169 = vsub.f32 %v1585, %v2137
      %v2170 = vsub.f32 %v1586, %v2138
      %v2171 = vsub.f32 %v1587, %v2139
      %v2172 = vsub.f32 %v1588, %v2140
      %v2173 = vsub.f32 %v1589, %v2141
      %v2174 = vsub.f32 %v1590, %v2142
      %v2175 = vsub.f32 %v1591, %v2143
      %v2176 = vsub.f32 %v1592, %v2144
      %v2177 = vsub.f32 %v1593, %v2145
      %v2178 = vsub.f32 %v1594, %v2146
      %v2179 = vsub.f32 %v1595, %v2147
      %v2180 = vsub.f32 %v1596, %v2148
      %v2181 = vsub.f32 %v1597, %v2149
      %v2182 = vsub.f32 %v1598, %v2150
      %v2183 = vsub.f32 %v1599, %v2151
      %v2184 = vmul.f32 %v1442, %v2152
      %v2185 = vmul.f32 %v1445, %v2153
      %v2186 = vmul.f32 %v1450, %v2154
      %v2187 = vmul.f32 %v1453, %v2155
      %v2188 = vmul.f32 %v1458, %v2156
      %v2189 = vmul.f32 %v1461, %v2157
      %v2190 = vmul.f32 %v1466, %v2158
      %v2191 = vmul.f32 %v1469, %v2159
      %v2192 = vmul.f32 %v1474, %v2160
      %v2193 = vmul.f32 %v1477, %v2161
      %v2194 = vmul.f32 %v1482, %v2162
      %v2195 = vmul.f32 %v1485, %v2163
      %v2196 = vmul.f32 %v1490, %v2164
      %v2197 = vmul.f32 %v1493, %v2165
      %v2198 = vmul.f32 %v1498, %v2166
      %v2199 = vmul.f32 %v1501, %v2167
      %v2200 = vmul.f32 %v1506, %v2168
      %v2201 = vmul.f32 %v1509, %v2169
      %v2202 = vmul.f32 %v1514, %v2170
      %v2203 = vmul.f32 %v1517, %v2171
      %v2204 = vmul.f32 %v1522, %v2172
      %v2205 = vmul.f32 %v1525, %v2173
      %v2206 = vmul.f32 %v1530, %v2174
      %v2207 = vmul.f32 %v1533, %v2175
      %v2208 = vmul.f32 %v1538, %v2176
      %v2209 = vmul.f32 %v1541, %v2177
      %v2210 = vmul.f32 %v1546, %v2178
      %v2211 = vmul.f32 %v1549, %v2179
      %v2212 = vmul.f32 %v1554, %v2180
      %v2213 = vmul.f32 %v1557, %v2181
      %v2214 = vmul.f32 %v1562, %v2182
      %v2215 = vmul.f32 %v1565, %v2183
      %v2216 = vsel %vm489, %v2184, 0.0
      %v2217 = vrot.slane %v2216, 4
      %v2218 = vadd.f32 %v2216, %v2217
      %v2219 = vrot.slane %v2218, 2
      %v2220 = vadd.f32 %v2218, %v2219
      %v2221 = vrot.slane %v2220, 1
      %v2222 = vadd.f32 %v2220, %v2221
      %v2223 = vsel %vm489, %v2185, 0.0
      %v2224 = vrot.slane %v2223, 4
      %v2225 = vadd.f32 %v2223, %v2224
      %v2226 = vrot.slane %v2225, 2
      %v2227 = vadd.f32 %v2225, %v2226
      %v2228 = vrot.slane %v2227, 1
      %v2229 = vadd.f32 %v2227, %v2228
      %v2230 = vsel %vm489, %v2186, 0.0
      %v2231 = vrot.slane %v2230, 4
      %v2232 = vadd.f32 %v2230, %v2231
      %v2233 = vrot.slane %v2232, 2
      %v2234 = vadd.f32 %v2232, %v2233
      %v2235 = vrot.slane %v2234, 1
      %v2236 = vadd.f32 %v2234, %v2235
      %v2237 = vsel %vm489, %v2187, 0.0
      %v2238 = vrot.slane %v2237, 4
      %v2239 = vadd.f32 %v2237, %v2238
      %v2240 = vrot.slane %v2239, 2
      %v2241 = vadd.f32 %v2239, %v2240
      %v2242 = vrot.slane %v2241, 1
      %v2243 = vadd.f32 %v2241, %v2242
      %v2244 = vsel %vm489, %v2188, 0.0
      %v2245 = vrot.slane %v2244, 4
      %v2246 = vadd.f32 %v2244, %v2245
      %v2247 = vrot.slane %v2246, 2
      %v2248 = vadd.f32 %v2246, %v2247
      %v2249 = vrot.slane %v2248, 1
      %v2250 = vadd.f32 %v2248, %v2249
      %v2251 = vsel %vm489, %v2189, 0.0
      %v2252 = vrot.slane %v2251, 4
      %v2253 = vadd.f32 %v2251, %v2252
      %v2254 = vrot.slane %v2253, 2
      %v2255 = vadd.f32 %v2253, %v2254
      %v2256 = vrot.slane %v2255, 1
      %v2257 = vadd.f32 %v2255, %v2256
      %v2258 = vsel %vm489, %v2190, 0.0
      %v2259 = vrot.slane %v2258, 4
      %v2260 = vadd.f32 %v2258, %v2259
      %v2261 = vrot.slane %v2260, 2
      %v2262 = vadd.f32 %v2260, %v2261
      %v2263 = vrot.slane %v2262, 1
      %v2264 = vadd.f32 %v2262, %v2263
      %v2265 = vsel %vm489, %v2191, 0.0
      %v2266 = vrot.slane %v2265, 4
      %v2267 = vadd.f32 %v2265, %v2266
      %v2268 = vrot.slane %v2267, 2
      %v2269 = vadd.f32 %v2267, %v2268
      %v2270 = vrot.slane %v2269, 1
      %v2271 = vadd.f32 %v2269, %v2270
      %v2272 = vsel %vm489, %v2192, 0.0
      %v2273 = vrot.slane %v2272, 4
      %v2274 = vadd.f32 %v2272, %v2273
      %v2275 = vrot.slane %v2274, 2
      %v2276 = vadd.f32 %v2274, %v2275
      %v2277 = vrot.slane %v2276, 1
      %v2278 = vadd.f32 %v2276, %v2277
      %v2279 = vsel %vm489, %v2193, 0.0
      %v2280 = vrot.slane %v2279, 4
      %v2281 = vadd.f32 %v2279, %v2280
      %v2282 = vrot.slane %v2281, 2
      %v2283 = vadd.f32 %v2281, %v2282
      %v2284 = vrot.slane %v2283, 1
      %v2285 = vadd.f32 %v2283, %v2284
      %v2286 = vsel %vm489, %v2194, 0.0
      %v2287 = vrot.slane %v2286, 4
      %v2288 = vadd.f32 %v2286, %v2287
      %v2289 = vrot.slane %v2288, 2
      %v2290 = vadd.f32 %v2288, %v2289
      %v2291 = vrot.slane %v2290, 1
      %v2292 = vadd.f32 %v2290, %v2291
      %v2293 = vsel %vm489, %v2195, 0.0
      %v2294 = vrot.slane %v2293, 4
      %v2295 = vadd.f32 %v2293, %v2294
      %v2296 = vrot.slane %v2295, 2
      %v2297 = vadd.f32 %v2295, %v2296
      %v2298 = vrot.slane %v2297, 1
      %v2299 = vadd.f32 %v2297, %v2298
      %v2300 = vsel %vm489, %v2196, 0.0
      %v2301 = vrot.slane %v2300, 4
      %v2302 = vadd.f32 %v2300, %v2301
      %v2303 = vrot.slane %v2302, 2
      %v2304 = vadd.f32 %v2302, %v2303
      %v2305 = vrot.slane %v2304, 1
      %v2306 = vadd.f32 %v2304, %v2305
      %v2307 = vsel %vm489, %v2197, 0.0
      %v2308 = vrot.slane %v2307, 4
      %v2309 = vadd.f32 %v2307, %v2308
      %v2310 = vrot.slane %v2309, 2
      %v2311 = vadd.f32 %v2309, %v2310
      %v2312 = vrot.slane %v2311, 1
      %v2313 = vadd.f32 %v2311, %v2312
      %v2314 = vsel %vm489, %v2198, 0.0
      %v2315 = vrot.slane %v2314, 4
      %v2316 = vadd.f32 %v2314, %v2315
      %v2317 = vrot.slane %v2316, 2
      %v2318 = vadd.f32 %v2316, %v2317
      %v2319 = vrot.slane %v2318, 1
      %v2320 = vadd.f32 %v2318, %v2319
      %v2321 = vsel %vm489, %v2199, 0.0
      %v2322 = vrot.slane %v2321, 4
      %v2323 = vadd.f32 %v2321, %v2322
      %v2324 = vrot.slane %v2323, 2
      %v2325 = vadd.f32 %v2323, %v2324
      %v2326 = vrot.slane %v2325, 1
      %v2327 = vadd.f32 %v2325, %v2326
      %v2328 = vsel %vm489, %v2200, 0.0
      %v2329 = vrot.slane %v2328, 4
      %v2330 = vadd.f32 %v2328, %v2329
      %v2331 = vrot.slane %v2330, 2
      %v2332 = vadd.f32 %v2330, %v2331
      %v2333 = vrot.slane %v2332, 1
      %v2334 = vadd.f32 %v2332, %v2333
      %v2335 = vsel %vm489, %v2201, 0.0
      %v2336 = vrot.slane %v2335, 4
      %v2337 = vadd.f32 %v2335, %v2336
      %v2338 = vrot.slane %v2337, 2
      %v2339 = vadd.f32 %v2337, %v2338
      %v2340 = vrot.slane %v2339, 1
      %v2341 = vadd.f32 %v2339, %v2340
      %v2342 = vsel %vm489, %v2202, 0.0
      %v2343 = vrot.slane %v2342, 4
      %v2344 = vadd.f32 %v2342, %v2343
      %v2345 = vrot.slane %v2344, 2
      %v2346 = vadd.f32 %v2344, %v2345
      %v2347 = vrot.slane %v2346, 1
      %v2348 = vadd.f32 %v2346, %v2347
      %v2349 = vsel %vm489, %v2203, 0.0
      %v2350 = vrot.slane %v2349, 4
      %v2351 = vadd.f32 %v2349, %v2350
      %v2352 = vrot.slane %v2351, 2
      %v2353 = vadd.f32 %v2351, %v2352
      %v2354 = vrot.slane %v2353, 1
      %v2355 = vadd.f32 %v2353, %v2354
      %v2356 = vsel %vm489, %v2204, 0.0
      %v2357 = vrot.slane %v2356, 4
      %v2358 = vadd.f32 %v2356, %v2357
      %v2359 = vrot.slane %v2358, 2
      %v2360 = vadd.f32 %v2358, %v2359
      %v2361 = vrot.slane %v2360, 1
      %v2362 = vadd.f32 %v2360, %v2361
      %v2363 = vsel %vm489, %v2205, 0.0
      %v2364 = vrot.slane %v2363, 4
      %v2365 = vadd.f32 %v2363, %v2364
      %v2366 = vrot.slane %v2365, 2
      %v2367 = vadd.f32 %v2365, %v2366
      %v2368 = vrot.slane %v2367, 1
      %v2369 = vadd.f32 %v2367, %v2368
      %v2370 = vsel %vm489, %v2206, 0.0
      %v2371 = vrot.slane %v2370, 4
      %v2372 = vadd.f32 %v2370, %v2371
      %v2373 = vrot.slane %v2372, 2
      %v2374 = vadd.f32 %v2372, %v2373
      %v2375 = vrot.slane %v2374, 1
      %v2376 = vadd.f32 %v2374, %v2375
      %v2377 = vsel %vm489, %v2207, 0.0
      %v2378 = vrot.slane %v2377, 4
      %v2379 = vadd.f32 %v2377, %v2378
      %v2380 = vrot.slane %v2379, 2
      %v2381 = vadd.f32 %v2379, %v2380
      %v2382 = vrot.slane %v2381, 1
      %v2383 = vadd.f32 %v2381, %v2382
      %v2384 = vsel %vm489, %v2208, 0.0
      %v2385 = vrot.slane %v2384, 4
      %v2386 = vadd.f32 %v2384, %v2385
      %v2387 = vrot.slane %v2386, 2
      %v2388 = vadd.f32 %v2386, %v2387
      %v2389 = vrot.slane %v2388, 1
      %v2390 = vadd.f32 %v2388, %v2389
      %v2391 = vsel %vm489, %v2209, 0.0
      %v2392 = vrot.slane %v2391, 4
      %v2393 = vadd.f32 %v2391, %v2392
      %v2394 = vrot.slane %v2393, 2
      %v2395 = vadd.f32 %v2393, %v2394
      %v2396 = vrot.slane %v2395, 1
      %v2397 = vadd.f32 %v2395, %v2396
      %v2398 = vsel %vm489, %v2210, 0.0
      %v2399 = vrot.slane %v2398, 4
      %v2400 = vadd.f32 %v2398, %v2399
      %v2401 = vrot.slane %v2400, 2
      %v2402 = vadd.f32 %v2400, %v2401
      %v2403 = vrot.slane %v2402, 1
      %v2404 = vadd.f32 %v2402, %v2403
      %v2405 = vsel %vm489, %v2211, 0.0
      %v2406 = vrot.slane %v2405, 4
      %v2407 = vadd.f32 %v2405, %v2406
      %v2408 = vrot.slane %v2407, 2
      %v2409 = vadd.f32 %v2407, %v2408
      %v2410 = vrot.slane %v2409, 1
      %v2411 = vadd.f32 %v2409, %v2410
      %v2412 = vsel %vm489, %v2212, 0.0
      %v2413 = vrot.slane %v2412, 4
      %v2414 = vadd.f32 %v2412, %v2413
      %v2415 = vrot.slane %v2414, 2
      %v2416 = vadd.f32 %v2414, %v2415
      %v2417 = vrot.slane %v2416, 1
      %v2418 = vadd.f32 %v2416, %v2417
      %v2419 = vsel %vm489, %v2213, 0.0
      %v2420 = vrot.slane %v2419, 4
      %v2421 = vadd.f32 %v2419, %v2420
      %v2422 = vrot.slane %v2421, 2
      %v2423 = vadd.f32 %v2421, %v2422
      %v2424 = vrot.slane %v2423, 1
      %v2425 = vadd.f32 %v2423, %v2424
      %v2426 = vsel %vm489, %v2214, 0.0
      %v2427 = vrot.slane %v2426, 4
      %v2428 = vadd.f32 %v2426, %v2427
      %v2429 = vrot.slane %v2428, 2
      %v2430 = vadd.f32 %v2428, %v2429
      %v2431 = vrot.slane %v2430, 1
      %v2432 = vadd.f32 %v2430, %v2431
      %v2433 = vsel %vm489, %v2215, 0.0
      %v2434 = vrot.slane %v2433, 4
      %v2435 = vadd.f32 %v2433, %v2434
      %v2436 = vrot.slane %v2435, 2
      %v2437 = vadd.f32 %v2435, %v2436
      %v2438 = vrot.slane %v2437, 1
      %v2439 = vadd.f32 %v2437, %v2438
      %2472 = vrot.lane.b32.xlu0 %v494, 96
      %v2473 = vpop.permute.xlu0 %2472
      %2474 = vrot.lane.b32.xlu0 %v495, 96
      %v2475 = vpop.permute.xlu0 %2474
      %2476 = vrot.lane.b32.xlu0 %v496, 96
      %v2477 = vpop.permute.xlu0 %2476
      %2478 = vrot.lane.b32.xlu0 %v497, 96
      %v2479 = vpop.permute.xlu0 %2478
      %2480 = vrot.lane.b32.xlu0 %v498, 96
      %v2481 = vpop.permute.xlu0 %2480
      %2482 = vrot.lane.b32.xlu0 %v499, 96
      %v2483 = vpop.permute.xlu0 %2482
      %2484 = vrot.lane.b32.xlu0 %v500, 96
      %v2485 = vpop.permute.xlu0 %2484
      %2486 = vrot.lane.b32.xlu0 %v501, 96
      %v2487 = vpop.permute.xlu0 %2486
      %2488 = vrot.lane.b32.xlu0 %v502, 96
      %v2489 = vpop.permute.xlu0 %2488
      %2490 = vrot.lane.b32.xlu0 %v503, 96
      %v2491 = vpop.permute.xlu0 %2490
      %2492 = vrot.lane.b32.xlu0 %v504, 96
      %v2493 = vpop.permute.xlu0 %2492
      %2494 = vrot.lane.b32.xlu0 %v505, 96
      %v2495 = vpop.permute.xlu0 %2494
      %2496 = vrot.lane.b32.xlu0 %v506, 96
      %v2497 = vpop.permute.xlu0 %2496
      %2498 = vrot.lane.b32.xlu0 %v507, 96
      %v2499 = vpop.permute.xlu0 %2498
      %2500 = vrot.lane.b32.xlu0 %v508, 96
      %v2501 = vpop.permute.xlu0 %2500
      %2502 = vrot.lane.b32.xlu0 %v509, 96
      %v2503 = vpop.permute.xlu0 %2502
      %2504 = vrot.lane.b32.xlu0 %v510, 96
      %v2505 = vpop.permute.xlu0 %2504
      %2506 = vrot.lane.b32.xlu0 %v511, 96
      %v2507 = vpop.permute.xlu0 %2506
      %2508 = vrot.lane.b32.xlu0 %v512, 96
      %v2509 = vpop.permute.xlu0 %2508
      %2510 = vrot.lane.b32.xlu0 %v513, 96
      %v2511 = vpop.permute.xlu0 %2510
      %2512 = vrot.lane.b32.xlu0 %v514, 96
      %v2513 = vpop.permute.xlu0 %2512
      %2514 = vrot.lane.b32.xlu0 %v515, 96
      %v2515 = vpop.permute.xlu0 %2514
      %2516 = vrot.lane.b32.xlu0 %v516, 96
      %v2517 = vpop.permute.xlu0 %2516
      %2518 = vrot.lane.b32.xlu0 %v517, 96
      %v2519 = vpop.permute.xlu0 %2518
      %2520 = vrot.lane.b32.xlu0 %v518, 96
      %v2521 = vpop.permute.xlu0 %2520
      %2522 = vrot.lane.b32.xlu0 %v519, 96
      %v2523 = vpop.permute.xlu0 %2522
      %2524 = vrot.lane.b32.xlu0 %v520, 96
      %v2525 = vpop.permute.xlu0 %2524
      %2526 = vrot.lane.b32.xlu0 %v521, 96
      %v2527 = vpop.permute.xlu0 %2526
      %2528 = vrot.lane.b32.xlu0 %v522, 96
      %v2529 = vpop.permute.xlu0 %2528
      %2530 = vrot.lane.b32.xlu0 %v523, 96
      %v2531 = vpop.permute.xlu0 %2530
      %2532 = vrot.lane.b32.xlu0 %v524, 96
      %v2533 = vpop.permute.xlu0 %2532
      %2534 = vrot.lane.b32.xlu0 %v525, 96
      %v2535 = vpop.permute.xlu0 %2534
      %v2568 = vmul.f32 %v1803, %v2473
      %v2569 = vmul.f32 %v1807, %v2475
      %v2570 = vmul.f32 %v1811, %v2477
      %v2571 = vmul.f32 %v1815, %v2479
      %v2572 = vmul.f32 %v1819, %v2481
      %v2573 = vmul.f32 %v1823, %v2483
      %v2574 = vmul.f32 %v1827, %v2485
      %v2575 = vmul.f32 %v1831, %v2487
      %v2576 = vmul.f32 %v1835, %v2489
      %v2577 = vmul.f32 %v1839, %v2491
      %v2578 = vmul.f32 %v1843, %v2493
      %v2579 = vmul.f32 %v1847, %v2495
      %v2580 = vmul.f32 %v1851, %v2497
      %v2581 = vmul.f32 %v1855, %v2499
      %v2582 = vmul.f32 %v1859, %v2501
      %v2583 = vmul.f32 %v1863, %v2503
      %v2584 = vmul.f32 %v1867, %v2505
      %v2585 = vmul.f32 %v1871, %v2507
      %v2586 = vmul.f32 %v1875, %v2509
      %v2587 = vmul.f32 %v1879, %v2511
      %v2588 = vmul.f32 %v1883, %v2513
      %v2589 = vmul.f32 %v1887, %v2515
      %v2590 = vmul.f32 %v1891, %v2517
      %v2591 = vmul.f32 %v1895, %v2519
      %v2592 = vmul.f32 %v1899, %v2521
      %v2593 = vmul.f32 %v1903, %v2523
      %v2594 = vmul.f32 %v1907, %v2525
      %v2595 = vmul.f32 %v1911, %v2527
      %v2596 = vmul.f32 %v1915, %v2529
      %v2597 = vmul.f32 %v1919, %v2531
      %v2598 = vmul.f32 %v1923, %v2533
      %v2599 = vmul.f32 %v1927, %v2535
      %2600 = vrot.lane.b32.xlu0 %v494, 32
      %v2601 = vpop.permute.xlu0 %2600
      %2602 = vrot.lane.b32.xlu0 %v495, 32
      %v2603 = vpop.permute.xlu0 %2602
      %2604 = vrot.lane.b32.xlu0 %v496, 32
      %v2605 = vpop.permute.xlu0 %2604
      %2606 = vrot.lane.b32.xlu0 %v497, 32
      %v2607 = vpop.permute.xlu0 %2606
      %2608 = vrot.lane.b32.xlu0 %v498, 32
      %v2609 = vpop.permute.xlu0 %2608
      %2610 = vrot.lane.b32.xlu0 %v499, 32
      %v2611 = vpop.permute.xlu0 %2610
      %2612 = vrot.lane.b32.xlu0 %v500, 32
      %v2613 = vpop.permute.xlu0 %2612
      %2614 = vrot.lane.b32.xlu0 %v501, 32
      %v2615 = vpop.permute.xlu0 %2614
      %2616 = vrot.lane.b32.xlu0 %v502, 32
      %v2617 = vpop.permute.xlu0 %2616
      %2618 = vrot.lane.b32.xlu0 %v503, 32
      %v2619 = vpop.permute.xlu0 %2618
      %2620 = vrot.lane.b32.xlu0 %v504, 32
      %v2621 = vpop.permute.xlu0 %2620
      %2622 = vrot.lane.b32.xlu0 %v505, 32
      %v2623 = vpop.permute.xlu0 %2622
      %2624 = vrot.lane.b32.xlu0 %v506, 32
      %v2625 = vpop.permute.xlu0 %2624
      %2626 = vrot.lane.b32.xlu0 %v507, 32
      %v2627 = vpop.permute.xlu0 %2626
      %2628 = vrot.lane.b32.xlu0 %v508, 32
      %v2629 = vpop.permute.xlu0 %2628
      %2630 = vrot.lane.b32.xlu0 %v509, 32
      %v2631 = vpop.permute.xlu0 %2630
      %2632 = vrot.lane.b32.xlu0 %v510, 32
      %v2633 = vpop.permute.xlu0 %2632
      %2634 = vrot.lane.b32.xlu0 %v511, 32
      %v2635 = vpop.permute.xlu0 %2634
      %2636 = vrot.lane.b32.xlu0 %v512, 32
      %v2637 = vpop.permute.xlu0 %2636
      %2638 = vrot.lane.b32.xlu0 %v513, 32
      %v2639 = vpop.permute.xlu0 %2638
      %2640 = vrot.lane.b32.xlu0 %v514, 32
      %v2641 = vpop.permute.xlu0 %2640
      %2642 = vrot.lane.b32.xlu0 %v515, 32
      %v2643 = vpop.permute.xlu0 %2642
      %2644 = vrot.lane.b32.xlu0 %v516, 32
      %v2645 = vpop.permute.xlu0 %2644
      %2646 = vrot.lane.b32.xlu0 %v517, 32
      %v2647 = vpop.permute.xlu0 %2646
      %2648 = vrot.lane.b32.xlu0 %v518, 32
      %v2649 = vpop.permute.xlu0 %2648
      %2650 = vrot.lane.b32.xlu0 %v519, 32
      %v2651 = vpop.permute.xlu0 %2650
      %2652 = vrot.lane.b32.xlu0 %v520, 32
      %v2653 = vpop.permute.xlu0 %2652
      %2654 = vrot.lane.b32.xlu0 %v521, 32
      %v2655 = vpop.permute.xlu0 %2654
      %2656 = vrot.lane.b32.xlu0 %v522, 32
      %v2657 = vpop.permute.xlu0 %2656
      %2658 = vrot.lane.b32.xlu0 %v523, 32
      %v2659 = vpop.permute.xlu0 %2658
      %2660 = vrot.lane.b32.xlu0 %v524, 32
      %v2661 = vpop.permute.xlu0 %2660
      %2662 = vrot.lane.b32.xlu0 %v525, 32
      %v2663 = vpop.permute.xlu0 %2662
      %v2696 = vmul.f32 %v1803, %v2601
      %v2697 = vmul.f32 %v1807, %v2603
      %v2698 = vmul.f32 %v1811, %v2605
      %v2699 = vmul.f32 %v1815, %v2607
      %v2700 = vmul.f32 %v1819, %v2609
      %v2701 = vmul.f32 %v1823, %v2611
      %v2702 = vmul.f32 %v1827, %v2613
      %v2703 = vmul.f32 %v1831, %v2615
      %v2704 = vmul.f32 %v1835, %v2617
      %v2705 = vmul.f32 %v1839, %v2619
      %v2706 = vmul.f32 %v1843, %v2621
      %v2707 = vmul.f32 %v1847, %v2623
      %v2708 = vmul.f32 %v1851, %v2625
      %v2709 = vmul.f32 %v1855, %v2627
      %v2710 = vmul.f32 %v1859, %v2629
      %v2711 = vmul.f32 %v1863, %v2631
      %v2712 = vmul.f32 %v1867, %v2633
      %v2713 = vmul.f32 %v1871, %v2635
      %v2714 = vmul.f32 %v1875, %v2637
      %v2715 = vmul.f32 %v1879, %v2639
      %v2716 = vmul.f32 %v1883, %v2641
      %v2717 = vmul.f32 %v1887, %v2643
      %v2718 = vmul.f32 %v1891, %v2645
      %v2719 = vmul.f32 %v1895, %v2647
      %v2720 = vmul.f32 %v1899, %v2649
      %v2721 = vmul.f32 %v1903, %v2651
      %v2722 = vmul.f32 %v1907, %v2653
      %v2723 = vmul.f32 %v1911, %v2655
      %v2724 = vmul.f32 %v1915, %v2657
      %v2725 = vmul.f32 %v1919, %v2659
      %v2726 = vmul.f32 %v1923, %v2661
      %v2727 = vmul.f32 %v1927, %v2663
      %2760 = vrot.lane.b32.xlu0 %v2696, 96
      %v2761 = vpop.permute.xlu0 %2760
      %2762 = vrot.lane.b32.xlu0 %v2697, 96
      %v2763 = vpop.permute.xlu0 %2762
      %2764 = vrot.lane.b32.xlu0 %v2698, 96
      %v2765 = vpop.permute.xlu0 %2764
      %2766 = vrot.lane.b32.xlu0 %v2699, 96
      %v2767 = vpop.permute.xlu0 %2766
      %2768 = vrot.lane.b32.xlu0 %v2700, 96
      %v2769 = vpop.permute.xlu0 %2768
      %2770 = vrot.lane.b32.xlu0 %v2701, 96
      %v2771 = vpop.permute.xlu0 %2770
      %2772 = vrot.lane.b32.xlu0 %v2702, 96
      %v2773 = vpop.permute.xlu0 %2772
      %2774 = vrot.lane.b32.xlu0 %v2703, 96
      %v2775 = vpop.permute.xlu0 %2774
      %2776 = vrot.lane.b32.xlu0 %v2704, 96
      %v2777 = vpop.permute.xlu0 %2776
      %2778 = vrot.lane.b32.xlu0 %v2705, 96
      %v2779 = vpop.permute.xlu0 %2778
      %2780 = vrot.lane.b32.xlu0 %v2706, 96
      %v2781 = vpop.permute.xlu0 %2780
      %2782 = vrot.lane.b32.xlu0 %v2707, 96
      %v2783 = vpop.permute.xlu0 %2782
      %2784 = vrot.lane.b32.xlu0 %v2708, 96
      %v2785 = vpop.permute.xlu0 %2784
      %2786 = vrot.lane.b32.xlu0 %v2709, 96
      %v2787 = vpop.permute.xlu0 %2786
      %2788 = vrot.lane.b32.xlu0 %v2710, 96
      %v2789 = vpop.permute.xlu0 %2788
      %2790 = vrot.lane.b32.xlu0 %v2711, 96
      %v2791 = vpop.permute.xlu0 %2790
      %2792 = vrot.lane.b32.xlu0 %v2712, 96
      %v2793 = vpop.permute.xlu0 %2792
      %2794 = vrot.lane.b32.xlu0 %v2713, 96
      %v2795 = vpop.permute.xlu0 %2794
      %2796 = vrot.lane.b32.xlu0 %v2714, 96
      %v2797 = vpop.permute.xlu0 %2796
      %2798 = vrot.lane.b32.xlu0 %v2715, 96
      %v2799 = vpop.permute.xlu0 %2798
      %2800 = vrot.lane.b32.xlu0 %v2716, 96
      %v2801 = vpop.permute.xlu0 %2800
      %2802 = vrot.lane.b32.xlu0 %v2717, 96
      %v2803 = vpop.permute.xlu0 %2802
      %2804 = vrot.lane.b32.xlu0 %v2718, 96
      %v2805 = vpop.permute.xlu0 %2804
      %2806 = vrot.lane.b32.xlu0 %v2719, 96
      %v2807 = vpop.permute.xlu0 %2806
      %2808 = vrot.lane.b32.xlu0 %v2720, 96
      %v2809 = vpop.permute.xlu0 %2808
      %2810 = vrot.lane.b32.xlu0 %v2721, 96
      %v2811 = vpop.permute.xlu0 %2810
      %2812 = vrot.lane.b32.xlu0 %v2722, 96
      %v2813 = vpop.permute.xlu0 %2812
      %2814 = vrot.lane.b32.xlu0 %v2723, 96
      %v2815 = vpop.permute.xlu0 %2814
      %2816 = vrot.lane.b32.xlu0 %v2724, 96
      %v2817 = vpop.permute.xlu0 %2816
      %2818 = vrot.lane.b32.xlu0 %v2725, 96
      %v2819 = vpop.permute.xlu0 %2818
      %2820 = vrot.lane.b32.xlu0 %v2726, 96
      %v2821 = vpop.permute.xlu0 %2820
      %2822 = vrot.lane.b32.xlu0 %v2727, 96
      %v2823 = vpop.permute.xlu0 %2822
      %v2856 = vadd.f32 %v2568, %v2761
      %v2857 = vadd.f32 %v2569, %v2763
      %v2858 = vadd.f32 %v2570, %v2765
      %v2859 = vadd.f32 %v2571, %v2767
      %v2860 = vadd.f32 %v2572, %v2769
      %v2861 = vadd.f32 %v2573, %v2771
      %v2862 = vadd.f32 %v2574, %v2773
      %v2863 = vadd.f32 %v2575, %v2775
      %v2864 = vadd.f32 %v2576, %v2777
      %v2865 = vadd.f32 %v2577, %v2779
      %v2866 = vadd.f32 %v2578, %v2781
      %v2867 = vadd.f32 %v2579, %v2783
      %v2868 = vadd.f32 %v2580, %v2785
      %v2869 = vadd.f32 %v2581, %v2787
      %v2870 = vadd.f32 %v2582, %v2789
      %v2871 = vadd.f32 %v2583, %v2791
      %v2872 = vadd.f32 %v2584, %v2793
      %v2873 = vadd.f32 %v2585, %v2795
      %v2874 = vadd.f32 %v2586, %v2797
      %v2875 = vadd.f32 %v2587, %v2799
      %v2876 = vadd.f32 %v2588, %v2801
      %v2877 = vadd.f32 %v2589, %v2803
      %v2878 = vadd.f32 %v2590, %v2805
      %v2879 = vadd.f32 %v2591, %v2807
      %v2880 = vadd.f32 %v2592, %v2809
      %v2881 = vadd.f32 %v2593, %v2811
      %v2882 = vadd.f32 %v2594, %v2813
      %v2883 = vadd.f32 %v2595, %v2815
      %v2884 = vadd.f32 %v2596, %v2817
      %v2885 = vadd.f32 %v2597, %v2819
      %v2886 = vadd.f32 %v2598, %v2821
      %v2887 = vadd.f32 %v2599, %v2823
      %2920 = vrot.lane.b32.xlu0 %v2856, 32
      %v2921 = vpop.permute.xlu0 %2920
      %2922 = vrot.lane.b32.xlu0 %v2857, 32
      %v2923 = vpop.permute.xlu0 %2922
      %2924 = vrot.lane.b32.xlu0 %v2858, 32
      %v2925 = vpop.permute.xlu0 %2924
      %2926 = vrot.lane.b32.xlu0 %v2859, 32
      %v2927 = vpop.permute.xlu0 %2926
      %2928 = vrot.lane.b32.xlu0 %v2860, 32
      %v2929 = vpop.permute.xlu0 %2928
      %2930 = vrot.lane.b32.xlu0 %v2861, 32
      %v2931 = vpop.permute.xlu0 %2930
      %2932 = vrot.lane.b32.xlu0 %v2862, 32
      %v2933 = vpop.permute.xlu0 %2932
      %2934 = vrot.lane.b32.xlu0 %v2863, 32
      %v2935 = vpop.permute.xlu0 %2934
      %2936 = vrot.lane.b32.xlu0 %v2864, 32
      %v2937 = vpop.permute.xlu0 %2936
      %2938 = vrot.lane.b32.xlu0 %v2865, 32
      %v2939 = vpop.permute.xlu0 %2938
      %2940 = vrot.lane.b32.xlu0 %v2866, 32
      %v2941 = vpop.permute.xlu0 %2940
      %2942 = vrot.lane.b32.xlu0 %v2867, 32
      %v2943 = vpop.permute.xlu0 %2942
      %2944 = vrot.lane.b32.xlu0 %v2868, 32
      %v2945 = vpop.permute.xlu0 %2944
      %2946 = vrot.lane.b32.xlu0 %v2869, 32
      %v2947 = vpop.permute.xlu0 %2946
      %2948 = vrot.lane.b32.xlu0 %v2870, 32
      %v2949 = vpop.permute.xlu0 %2948
      %2950 = vrot.lane.b32.xlu0 %v2871, 32
      %v2951 = vpop.permute.xlu0 %2950
      %2952 = vrot.lane.b32.xlu0 %v2872, 32
      %v2953 = vpop.permute.xlu0 %2952
      %2954 = vrot.lane.b32.xlu0 %v2873, 32
      %v2955 = vpop.permute.xlu0 %2954
      %2956 = vrot.lane.b32.xlu0 %v2874, 32
      %v2957 = vpop.permute.xlu0 %2956
      %2958 = vrot.lane.b32.xlu0 %v2875, 32
      %v2959 = vpop.permute.xlu0 %2958
      %2960 = vrot.lane.b32.xlu0 %v2876, 32
      %v2961 = vpop.permute.xlu0 %2960
      %2962 = vrot.lane.b32.xlu0 %v2877, 32
      %v2963 = vpop.permute.xlu0 %2962
      %2964 = vrot.lane.b32.xlu0 %v2878, 32
      %v2965 = vpop.permute.xlu0 %2964
      %2966 = vrot.lane.b32.xlu0 %v2879, 32
      %v2967 = vpop.permute.xlu0 %2966
      %2968 = vrot.lane.b32.xlu0 %v2880, 32
      %v2969 = vpop.permute.xlu0 %2968
      %2970 = vrot.lane.b32.xlu0 %v2881, 32
      %v2971 = vpop.permute.xlu0 %2970
      %2972 = vrot.lane.b32.xlu0 %v2882, 32
      %v2973 = vpop.permute.xlu0 %2972
      %2974 = vrot.lane.b32.xlu0 %v2883, 32
      %v2975 = vpop.permute.xlu0 %2974
      %2976 = vrot.lane.b32.xlu0 %v2884, 32
      %v2977 = vpop.permute.xlu0 %2976
      %2978 = vrot.lane.b32.xlu0 %v2885, 32
      %v2979 = vpop.permute.xlu0 %2978
      %2980 = vrot.lane.b32.xlu0 %v2886, 32
      %v2981 = vpop.permute.xlu0 %2980
      %2982 = vrot.lane.b32.xlu0 %v2887, 32
      %v2983 = vpop.permute.xlu0 %2982
      %v3016 = vsub.f32 %v1568, %v2921
      %v3017 = vsub.f32 %v1569, %v2923
      %v3018 = vsub.f32 %v1570, %v2925
      %v3019 = vsub.f32 %v1571, %v2927
      %v3020 = vsub.f32 %v1572, %v2929
      %v3021 = vsub.f32 %v1573, %v2931
      %v3022 = vsub.f32 %v1574, %v2933
      %v3023 = vsub.f32 %v1575, %v2935
      %v3024 = vsub.f32 %v1576, %v2937
      %v3025 = vsub.f32 %v1577, %v2939
      %v3026 = vsub.f32 %v1578, %v2941
      %v3027 = vsub.f32 %v1579, %v2943
      %v3028 = vsub.f32 %v1580, %v2945
      %v3029 = vsub.f32 %v1581, %v2947
      %v3030 = vsub.f32 %v1582, %v2949
      %v3031 = vsub.f32 %v1583, %v2951
      %v3032 = vsub.f32 %v1584, %v2953
      %v3033 = vsub.f32 %v1585, %v2955
      %v3034 = vsub.f32 %v1586, %v2957
      %v3035 = vsub.f32 %v1587, %v2959
      %v3036 = vsub.f32 %v1588, %v2961
      %v3037 = vsub.f32 %v1589, %v2963
      %v3038 = vsub.f32 %v1590, %v2965
      %v3039 = vsub.f32 %v1591, %v2967
      %v3040 = vsub.f32 %v1592, %v2969
      %v3041 = vsub.f32 %v1593, %v2971
      %v3042 = vsub.f32 %v1594, %v2973
      %v3043 = vsub.f32 %v1595, %v2975
      %v3044 = vsub.f32 %v1596, %v2977
      %v3045 = vsub.f32 %v1597, %v2979
      %v3046 = vsub.f32 %v1598, %v2981
      %v3047 = vsub.f32 %v1599, %v2983
      %v3048 = vmul.f32 %v1442, %v3016
      %v3049 = vmul.f32 %v1445, %v3017
      %v3050 = vmul.f32 %v1450, %v3018
      %v3051 = vmul.f32 %v1453, %v3019
      %v3052 = vmul.f32 %v1458, %v3020
      %v3053 = vmul.f32 %v1461, %v3021
      %v3054 = vmul.f32 %v1466, %v3022
      %v3055 = vmul.f32 %v1469, %v3023
      %v3056 = vmul.f32 %v1474, %v3024
      %v3057 = vmul.f32 %v1477, %v3025
      %v3058 = vmul.f32 %v1482, %v3026
      %v3059 = vmul.f32 %v1485, %v3027
      %v3060 = vmul.f32 %v1490, %v3028
      %v3061 = vmul.f32 %v1493, %v3029
      %v3062 = vmul.f32 %v1498, %v3030
      %v3063 = vmul.f32 %v1501, %v3031
      %v3064 = vmul.f32 %v1506, %v3032
      %v3065 = vmul.f32 %v1509, %v3033
      %v3066 = vmul.f32 %v1514, %v3034
      %v3067 = vmul.f32 %v1517, %v3035
      %v3068 = vmul.f32 %v1522, %v3036
      %v3069 = vmul.f32 %v1525, %v3037
      %v3070 = vmul.f32 %v1530, %v3038
      %v3071 = vmul.f32 %v1533, %v3039
      %v3072 = vmul.f32 %v1538, %v3040
      %v3073 = vmul.f32 %v1541, %v3041
      %v3074 = vmul.f32 %v1546, %v3042
      %v3075 = vmul.f32 %v1549, %v3043
      %v3076 = vmul.f32 %v1554, %v3044
      %v3077 = vmul.f32 %v1557, %v3045
      %v3078 = vmul.f32 %v1562, %v3046
      %v3079 = vmul.f32 %v1565, %v3047
      %vm3080 = vcmask 523520
      %v3081 = vsel %vm3080, %v3048, 0.0
      %v3082 = vrot.slane %v3081, 4
      %v3083 = vadd.f32 %v3081, %v3082
      %v3084 = vrot.slane %v3083, 2
      %v3085 = vadd.f32 %v3083, %v3084
      %v3086 = vrot.slane %v3085, 1
      %v3087 = vadd.f32 %v3085, %v3086
      %v3088 = vsel %vm3080, %v3049, 0.0
      %v3089 = vrot.slane %v3088, 4
      %v3090 = vadd.f32 %v3088, %v3089
      %v3091 = vrot.slane %v3090, 2
      %v3092 = vadd.f32 %v3090, %v3091
      %v3093 = vrot.slane %v3092, 1
      %v3094 = vadd.f32 %v3092, %v3093
      %v3095 = vsel %vm3080, %v3050, 0.0
      %v3096 = vrot.slane %v3095, 4
      %v3097 = vadd.f32 %v3095, %v3096
      %v3098 = vrot.slane %v3097, 2
      %v3099 = vadd.f32 %v3097, %v3098
      %v3100 = vrot.slane %v3099, 1
      %v3101 = vadd.f32 %v3099, %v3100
      %v3102 = vsel %vm3080, %v3051, 0.0
      %v3103 = vrot.slane %v3102, 4
      %v3104 = vadd.f32 %v3102, %v3103
      %v3105 = vrot.slane %v3104, 2
      %v3106 = vadd.f32 %v3104, %v3105
      %v3107 = vrot.slane %v3106, 1
      %v3108 = vadd.f32 %v3106, %v3107
      %v3109 = vsel %vm3080, %v3052, 0.0
      %v3110 = vrot.slane %v3109, 4
      %v3111 = vadd.f32 %v3109, %v3110
      %v3112 = vrot.slane %v3111, 2
      %v3113 = vadd.f32 %v3111, %v3112
      %v3114 = vrot.slane %v3113, 1
      %v3115 = vadd.f32 %v3113, %v3114
      %v3116 = vsel %vm3080, %v3053, 0.0
      %v3117 = vrot.slane %v3116, 4
      %v3118 = vadd.f32 %v3116, %v3117
      %v3119 = vrot.slane %v3118, 2
      %v3120 = vadd.f32 %v3118, %v3119
      %v3121 = vrot.slane %v3120, 1
      %v3122 = vadd.f32 %v3120, %v3121
      %v3123 = vsel %vm3080, %v3054, 0.0
      %v3124 = vrot.slane %v3123, 4
      %v3125 = vadd.f32 %v3123, %v3124
      %v3126 = vrot.slane %v3125, 2
      %v3127 = vadd.f32 %v3125, %v3126
      %v3128 = vrot.slane %v3127, 1
      %v3129 = vadd.f32 %v3127, %v3128
      %v3130 = vsel %vm3080, %v3055, 0.0
      %v3131 = vrot.slane %v3130, 4
      %v3132 = vadd.f32 %v3130, %v3131
      %v3133 = vrot.slane %v3132, 2
      %v3134 = vadd.f32 %v3132, %v3133
      %v3135 = vrot.slane %v3134, 1
      %v3136 = vadd.f32 %v3134, %v3135
      %v3137 = vsel %vm3080, %v3056, 0.0
      %v3138 = vrot.slane %v3137, 4
      %v3139 = vadd.f32 %v3137, %v3138
      %v3140 = vrot.slane %v3139, 2
      %v3141 = vadd.f32 %v3139, %v3140
      %v3142 = vrot.slane %v3141, 1
      %v3143 = vadd.f32 %v3141, %v3142
      %v3144 = vsel %vm3080, %v3057, 0.0
      %v3145 = vrot.slane %v3144, 4
      %v3146 = vadd.f32 %v3144, %v3145
      %v3147 = vrot.slane %v3146, 2
      %v3148 = vadd.f32 %v3146, %v3147
      %v3149 = vrot.slane %v3148, 1
      %v3150 = vadd.f32 %v3148, %v3149
      %v3151 = vsel %vm3080, %v3058, 0.0
      %v3152 = vrot.slane %v3151, 4
      %v3153 = vadd.f32 %v3151, %v3152
      %v3154 = vrot.slane %v3153, 2
      %v3155 = vadd.f32 %v3153, %v3154
      %v3156 = vrot.slane %v3155, 1
      %v3157 = vadd.f32 %v3155, %v3156
      %v3158 = vsel %vm3080, %v3059, 0.0
      %v3159 = vrot.slane %v3158, 4
      %v3160 = vadd.f32 %v3158, %v3159
      %v3161 = vrot.slane %v3160, 2
      %v3162 = vadd.f32 %v3160, %v3161
      %v3163 = vrot.slane %v3162, 1
      %v3164 = vadd.f32 %v3162, %v3163
      %v3165 = vsel %vm3080, %v3060, 0.0
      %v3166 = vrot.slane %v3165, 4
      %v3167 = vadd.f32 %v3165, %v3166
      %v3168 = vrot.slane %v3167, 2
      %v3169 = vadd.f32 %v3167, %v3168
      %v3170 = vrot.slane %v3169, 1
      %v3171 = vadd.f32 %v3169, %v3170
      %v3172 = vsel %vm3080, %v3061, 0.0
      %v3173 = vrot.slane %v3172, 4
      %v3174 = vadd.f32 %v3172, %v3173
      %v3175 = vrot.slane %v3174, 2
      %v3176 = vadd.f32 %v3174, %v3175
      %v3177 = vrot.slane %v3176, 1
      %v3178 = vadd.f32 %v3176, %v3177
      %v3179 = vsel %vm3080, %v3062, 0.0
      %v3180 = vrot.slane %v3179, 4
      %v3181 = vadd.f32 %v3179, %v3180
      %v3182 = vrot.slane %v3181, 2
      %v3183 = vadd.f32 %v3181, %v3182
      %v3184 = vrot.slane %v3183, 1
      %v3185 = vadd.f32 %v3183, %v3184
      %v3186 = vsel %vm3080, %v3063, 0.0
      %v3187 = vrot.slane %v3186, 4
      %v3188 = vadd.f32 %v3186, %v3187
      %v3189 = vrot.slane %v3188, 2
      %v3190 = vadd.f32 %v3188, %v3189
      %v3191 = vrot.slane %v3190, 1
      %v3192 = vadd.f32 %v3190, %v3191
      %v3193 = vsel %vm3080, %v3064, 0.0
      %v3194 = vrot.slane %v3193, 4
      %v3195 = vadd.f32 %v3193, %v3194
      %v3196 = vrot.slane %v3195, 2
      %v3197 = vadd.f32 %v3195, %v3196
      %v3198 = vrot.slane %v3197, 1
      %v3199 = vadd.f32 %v3197, %v3198
      %v3200 = vsel %vm3080, %v3065, 0.0
      %v3201 = vrot.slane %v3200, 4
      %v3202 = vadd.f32 %v3200, %v3201
      %v3203 = vrot.slane %v3202, 2
      %v3204 = vadd.f32 %v3202, %v3203
      %v3205 = vrot.slane %v3204, 1
      %v3206 = vadd.f32 %v3204, %v3205
      %v3207 = vsel %vm3080, %v3066, 0.0
      %v3208 = vrot.slane %v3207, 4
      %v3209 = vadd.f32 %v3207, %v3208
      %v3210 = vrot.slane %v3209, 2
      %v3211 = vadd.f32 %v3209, %v3210
      %v3212 = vrot.slane %v3211, 1
      %v3213 = vadd.f32 %v3211, %v3212
      %v3214 = vsel %vm3080, %v3067, 0.0
      %v3215 = vrot.slane %v3214, 4
      %v3216 = vadd.f32 %v3214, %v3215
      %v3217 = vrot.slane %v3216, 2
      %v3218 = vadd.f32 %v3216, %v3217
      %v3219 = vrot.slane %v3218, 1
      %v3220 = vadd.f32 %v3218, %v3219
      %v3221 = vsel %vm3080, %v3068, 0.0
      %v3222 = vrot.slane %v3221, 4
      %v3223 = vadd.f32 %v3221, %v3222
      %v3224 = vrot.slane %v3223, 2
      %v3225 = vadd.f32 %v3223, %v3224
      %v3226 = vrot.slane %v3225, 1
      %v3227 = vadd.f32 %v3225, %v3226
      %v3228 = vsel %vm3080, %v3069, 0.0
      %v3229 = vrot.slane %v3228, 4
      %v3230 = vadd.f32 %v3228, %v3229
      %v3231 = vrot.slane %v3230, 2
      %v3232 = vadd.f32 %v3230, %v3231
      %v3233 = vrot.slane %v3232, 1
      %v3234 = vadd.f32 %v3232, %v3233
      %v3235 = vsel %vm3080, %v3070, 0.0
      %v3236 = vrot.slane %v3235, 4
      %v3237 = vadd.f32 %v3235, %v3236
      %v3238 = vrot.slane %v3237, 2
      %v3239 = vadd.f32 %v3237, %v3238
      %v3240 = vrot.slane %v3239, 1
      %v3241 = vadd.f32 %v3239, %v3240
      %v3242 = vsel %vm3080, %v3071, 0.0
      %v3243 = vrot.slane %v3242, 4
      %v3244 = vadd.f32 %v3242, %v3243
      %v3245 = vrot.slane %v3244, 2
      %v3246 = vadd.f32 %v3244, %v3245
      %v3247 = vrot.slane %v3246, 1
      %v3248 = vadd.f32 %v3246, %v3247
      %v3249 = vsel %vm3080, %v3072, 0.0
      %v3250 = vrot.slane %v3249, 4
      %v3251 = vadd.f32 %v3249, %v3250
      %v3252 = vrot.slane %v3251, 2
      %v3253 = vadd.f32 %v3251, %v3252
      %v3254 = vrot.slane %v3253, 1
      %v3255 = vadd.f32 %v3253, %v3254
      %v3256 = vsel %vm3080, %v3073, 0.0
      %v3257 = vrot.slane %v3256, 4
      %v3258 = vadd.f32 %v3256, %v3257
      %v3259 = vrot.slane %v3258, 2
      %v3260 = vadd.f32 %v3258, %v3259
      %v3261 = vrot.slane %v3260, 1
      %v3262 = vadd.f32 %v3260, %v3261
      %v3263 = vsel %vm3080, %v3074, 0.0
      %v3264 = vrot.slane %v3263, 4
      %v3265 = vadd.f32 %v3263, %v3264
      %v3266 = vrot.slane %v3265, 2
      %v3267 = vadd.f32 %v3265, %v3266
      %v3268 = vrot.slane %v3267, 1
      %v3269 = vadd.f32 %v3267, %v3268
      %v3270 = vsel %vm3080, %v3075, 0.0
      %v3271 = vrot.slane %v3270, 4
      %v3272 = vadd.f32 %v3270, %v3271
      %v3273 = vrot.slane %v3272, 2
      %v3274 = vadd.f32 %v3272, %v3273
      %v3275 = vrot.slane %v3274, 1
      %v3276 = vadd.f32 %v3274, %v3275
      %v3277 = vsel %vm3080, %v3076, 0.0
      %v3278 = vrot.slane %v3277, 4
      %v3279 = vadd.f32 %v3277, %v3278
      %v3280 = vrot.slane %v3279, 2
      %v3281 = vadd.f32 %v3279, %v3280
      %v3282 = vrot.slane %v3281, 1
      %v3283 = vadd.f32 %v3281, %v3282
      %v3284 = vsel %vm3080, %v3077, 0.0
      %v3285 = vrot.slane %v3284, 4
      %v3286 = vadd.f32 %v3284, %v3285
      %v3287 = vrot.slane %v3286, 2
      %v3288 = vadd.f32 %v3286, %v3287
      %v3289 = vrot.slane %v3288, 1
      %v3290 = vadd.f32 %v3288, %v3289
      %v3291 = vsel %vm3080, %v3078, 0.0
      %v3292 = vrot.slane %v3291, 4
      %v3293 = vadd.f32 %v3291, %v3292
      %v3294 = vrot.slane %v3293, 2
      %v3295 = vadd.f32 %v3293, %v3294
      %v3296 = vrot.slane %v3295, 1
      %v3297 = vadd.f32 %v3295, %v3296
      %v3298 = vsel %vm3080, %v3079, 0.0
      %v3299 = vrot.slane %v3298, 4
      %v3300 = vadd.f32 %v3298, %v3299
      %v3301 = vrot.slane %v3300, 2
      %v3302 = vadd.f32 %v3300, %v3301
      %v3303 = vrot.slane %v3302, 1
      %v3304 = vadd.f32 %v3302, %v3303
      %vm3337 = vcmask 1041409
      %v3338 = vsel %vm3337, %v2229, %v2222
      %vm3339 = vcmask 1042434
      %v3340 = vsel %vm3339, %v2236, %v3338
      %vm3341 = vcmask 1043459
      %v3342 = vsel %vm3341, %v2243, %v3340
      %vm3343 = vcmask 1044484
      %v3344 = vsel %vm3343, %v2250, %v3342
      %vm3345 = vcmask 1045509
      %v3346 = vsel %vm3345, %v2257, %v3344
      %vm3347 = vcmask 1046534
      %v3348 = vsel %vm3347, %v2264, %v3346
      %vm3349 = vcmask 1047559
      %v3350 = vsel %vm3349, %v2271, %v3348
      %v3351 = vsel %vm3337, %v2285, %v2278
      %v3352 = vsel %vm3339, %v2292, %v3351
      %v3353 = vsel %vm3341, %v2299, %v3352
      %v3354 = vsel %vm3343, %v2306, %v3353
      %v3355 = vsel %vm3345, %v2313, %v3354
      %v3356 = vsel %vm3347, %v2320, %v3355
      %v3357 = vsel %vm3349, %v2327, %v3356
      %v3358 = vsel %vm3337, %v2341, %v2334
      %v3359 = vsel %vm3339, %v2348, %v3358
      %v3360 = vsel %vm3341, %v2355, %v3359
      %v3361 = vsel %vm3343, %v2362, %v3360
      %v3362 = vsel %vm3345, %v2369, %v3361
      %v3363 = vsel %vm3347, %v2376, %v3362
      %v3364 = vsel %vm3349, %v2383, %v3363
      %v3365 = vsel %vm3337, %v2397, %v2390
      %v3366 = vsel %vm3339, %v2404, %v3365
      %v3367 = vsel %vm3341, %v2411, %v3366
      %v3368 = vsel %vm3343, %v2418, %v3367
      %v3369 = vsel %vm3345, %v2425, %v3368
      %v3370 = vsel %vm3347, %v2432, %v3369
      %v3371 = vsel %vm3349, %v2439, %v3370
      %v3408 = vsel %vm3337, %v3094, %v3087
      %v3409 = vsel %vm3339, %v3101, %v3408
      %v3410 = vsel %vm3341, %v3108, %v3409
      %v3411 = vsel %vm3343, %v3115, %v3410
      %v3412 = vsel %vm3345, %v3122, %v3411
      %v3413 = vsel %vm3347, %v3129, %v3412
      %v3414 = vsel %vm3349, %v3136, %v3413
      %v3415 = vsel %vm3337, %v3150, %v3143
      %v3416 = vsel %vm3339, %v3157, %v3415
      %v3417 = vsel %vm3341, %v3164, %v3416
      %v3418 = vsel %vm3343, %v3171, %v3417
      %v3419 = vsel %vm3345, %v3178, %v3418
      %v3420 = vsel %vm3347, %v3185, %v3419
      %v3421 = vsel %vm3349, %v3192, %v3420
      %v3422 = vsel %vm3337, %v3206, %v3199
      %v3423 = vsel %vm3339, %v3213, %v3422
      %v3424 = vsel %vm3341, %v3220, %v3423
      %v3425 = vsel %vm3343, %v3227, %v3424
      %v3426 = vsel %vm3345, %v3234, %v3425
      %v3427 = vsel %vm3347, %v3241, %v3426
      %v3428 = vsel %vm3349, %v3248, %v3427
      %v3429 = vsel %vm3337, %v3262, %v3255
      %v3430 = vsel %vm3339, %v3269, %v3429
      %v3431 = vsel %vm3341, %v3276, %v3430
      %v3432 = vsel %vm3343, %v3283, %v3431
      %v3433 = vsel %vm3345, %v3290, %v3432
      %v3434 = vsel %vm3347, %v3297, %v3433
      %v3435 = vsel %vm3349, %v3304, %v3434
      %v3440 = vsel %vm489, %v3350, %v3414
      %v3441 = vsel %vm489, %v3357, %v3421
      %v3442 = vsel %vm489, %v3364, %v3428
      %v3443 = vsel %vm489, %v3371, %v3435
      %v3444 = vand.u32 2147483647, %v3440
      %v3445 = vand.u32 2147483647, %v3441
      %v3446 = vand.u32 2147483647, %v3442
      %v3447 = vand.u32 2147483647, %v3443
      %v3448 = vsel %vm567, %v3444, 0.0
      %3449 = vadd.xlane.f32.xlu0 %v3448
      %v3450 = vpop.xlane.xlu0 %3449
      %v3451 = vsel %vm567, %v3445, 0.0
      %3452 = vadd.xlane.f32.xlu0 %v3451
      %v3453 = vpop.xlane.xlu0 %3452
      %v3454 = vsel %vm567, %v3446, 0.0
      %3455 = vadd.xlane.f32.xlu0 %v3454
      %v3456 = vpop.xlane.xlu0 %3455
      %v3457 = vsel %vm567, %v3447, 0.0
      %3458 = vadd.xlane.f32.xlu0 %v3457
      %v3459 = vpop.xlane.xlu0 %3458
      %v3460 = vand.u32 2147483647, %v490
      %v3461 = vand.u32 2147483647, %v491
      %v3462 = vand.u32 2147483647, %v492
      %v3463 = vand.u32 2147483647, %v493
      %v3464 = vsel %vm567, %v3460, 0.0
      %3465 = vadd.xlane.f32.xlu0 %v3464
      %v3466 = vpop.xlane.xlu0 %3465
      %v3467 = vsel %vm567, %v3461, 0.0
      %3468 = vadd.xlane.f32.xlu0 %v3467
      %v3469 = vpop.xlane.xlu0 %3468
      %v3470 = vsel %vm567, %v3462, 0.0
      %3471 = vadd.xlane.f32.xlu0 %v3470
      %v3472 = vpop.xlane.xlu0 %3471
      %v3473 = vsel %vm567, %v3463, 0.0
      %3474 = vadd.xlane.f32.xlu0 %v3473
      %v3475 = vpop.xlane.xlu0 %3474
      %v3476 = vmul.f32 %v3450, 10.0
      %v3477 = vmul.f32 %v3453, 10.0
      %v3478 = vmul.f32 %v3456, 10.0
      %v3479 = vmul.f32 %v3459, 10.0
      %v3480 = vmul.f32 %v3466, 1e-09
      %v3481 = vmul.f32 %v3469, 1e-09
      %v3482 = vmul.f32 %v3472, 1e-09
      %v3483 = vmul.f32 %v3475, 1e-09
      %v3484 = vadd.f32 %v3476, %v3480
      %v3485 = vadd.f32 %v3477, %v3481
      %v3486 = vadd.f32 %v3478, %v3482
      %v3487 = vadd.f32 %v3479, %v3483
      %v3488 = vadd.f32 %v3484, 1e-30
      %v3489 = vadd.f32 %v3485, 1e-30
      %v3490 = vadd.f32 %v3486, 1e-30
      %v3491 = vadd.f32 %v3487, 1e-30
      %v3492 = vrcp.pop %v3488
      %v3493 = vrcp.pop %v3489
      %v3494 = vrcp.pop %v3490
      %v3495 = vrcp.pop %v3491
      %v3496 = vmul.f32 %v3466, %v3492
      %v3497 = vmul.f32 %v3469, %v3493
      %v3498 = vmul.f32 %v3472, %v3494
      %v3499 = vmul.f32 %v3475, %v3495
      %v3500 = vmul.f32 %v3440, %v3496
      %v3501 = vmul.f32 %v3441, %v3497
      %v3502 = vmul.f32 %v3442, %v3498
      %v3503 = vmul.f32 %v3443, %v3499
      %v3504 = vadd.f32 %v490, %v3500
      %v3505 = vadd.f32 %v491, %v3501
      %v3506 = vadd.f32 %v492, %v3502
      %v3507 = vadd.f32 %v493, %v3503
      %3508 = vst.msk [vmem:[%s354] sm:$0xff] %vm567, %v3504
      %3509 = vst.msk [vmem:[%s354 + $0x8] sm:$0xff] %vm567, %v3505
      %3510 = vst.msk [vmem:[%s354 + $0x10] sm:$0xff] %vm567, %v3506
      %3511 = vst.msk [vmem:[%s354 + $0x18] sm:$0xff] %vm567, %v3507
      %s3512 = smul.u32 4, %s19
      %p3513 = scmp.lt.s32.totalorder %s3512, 7
      %s3514 = scalar_select %p3513, %s3512, 7
      %s3515 = smul.addr %s3514, 8
      %s3516 = scalar_lea.vmem %s8, %s3515
      // Predicated region
      $region53: #{projection_aggregating.1} parent=51 // pred_check
        %p3517 = pneg %p220
      $region54: #{projection_aggregating.1} parent=51 // pred_check_branch
        %3519 = sbr.rel (%p3517) target = $region56
      $region55: #{projection_aggregating.1} parent=51 // pred_region
        %s3520 = smul.u32 4, %s19
      $region56: #{projection_aggregating.1} parent=51 // pred_fallthru
        _
    $region52: #{projection_aggregating.1} parent=5 // pred_fallthru
      _
    %p3521 = scmp.le.s32.totalorder 2, %s14
    // Predicated region
    $region57: #{projection_aggregating.1} parent=5 // pred_check
      %p3522 = pneg %p3521
    $region58: #{projection_aggregating.1} parent=5 // pred_check_branch
      %3524 = sbr.rel (%p3522) target = $region60
    $region59: #{projection_aggregating.1} parent=5 // pred_region
      %s3525 = ssub.s32 %s14, 2
      // Predicated region
      $region61: #{projection_aggregating.1} parent=59 // pred_check
        %p3526 = pneg %p226
      $region62: #{projection_aggregating.1} parent=59 // pred_check_branch
        %3528 = sbr.rel (%p3526) target = $region64
      $region63: #{projection_aggregating.1} parent=59 // pred_region
        %s3529 = smul.u32 4, %s20
        %p3530 = scmp.lt.s32.totalorder %s3529, 7
        %s3531 = scalar_select %p3530, %s3529, 7
        %s3532 = smul.addr %s3531, 8
        %s3533 = scalar_lea.vmem %s8, %s3532
      $region64: #{projection_aggregating.1} parent=59 // pred_fallthru
        _
    $region60: #{projection_aggregating.1} parent=5 // pred_fallthru
      _
  $region6: #{projection_aggregating.1} parent=0 // loop_footer
    %s18 = sadd.s32 1, %s14
  $region7: #{projection_aggregating.1} parent=0 // loop_footer_branch
    %13 = sbr.rel target = $region3
  $region8: #{projection_aggregating.1} parent=0 // loop_exit
    _

</llo_original>
